<compile_context>
chip_gen: v6e
topology: v6e:2x2x1
jax: 0.10.0
libtpu: 0.0.40
codegen_flags: <defaults>
</compile_context>

<pallas_src>
import functools

import jax
import jax.numpy as jnp
from jax.experimental import pallas as pl
from jax.experimental.pallas import tpu as pltpu

LOG_STD_MIN = -5.0
LOG_STD_MAX = 2.0
LANE = 128          # TPU lane width; mean/log_std halves are padded to this
_SUBLANE = 16       # bf16 sublane packing -> keep batch tiles multiples of 16
_VMEM_BUDGET = 40 * 1024 * 1024   # per-tile footprint budget (safe on v7x 64 MiB)


def _round_up(x, m):
    return ((x + m - 1) // m) * m


def _cdiv(a, b):
    return -(-a // b)


def _vmem_footprint(TB, obs_dim, h1p, h2p, out_lanes):
    """Conservative per-tile VMEM estimate (double-buffered I/O + weights + temps)."""
    io = 2 * TB * obs_dim * 2 + 2 * TB * LANE * 4 + 2 * TB * out_lanes * 4
    w = 2 * ((obs_dim * h1p + h1p * h2p + h2p * 2 * LANE) * 2
             + (h1p + h2p + 2 * LANE) * 4)
    act = 2 * TB * (h1p + h2p + 2 * LANE + 4 * LANE) * 4
    return io + w + act


def _choose_tiling(B, obs_dim, h1p, h2p, out_lanes, block_batch):
    """Pick TB so padding stays < one tile, >=2 tiles for v7x's 2 TCs, VMEM-safe."""
    n_tiles = max(1, _cdiv(B, block_batch))
    if n_tiles < 2 and B >= 2 * _SUBLANE:
        n_tiles = 2                       # keep both v7x TensorCores busy
    TB = _round_up(_cdiv(B, n_tiles), _SUBLANE)
    while TB > _SUBLANE and _vmem_footprint(TB, obs_dim, h1p, h2p, out_lanes) > _VMEM_BUDGET:
        TB = _round_up(TB // 2, _SUBLANE)
    B_pad = _round_up(B, TB)
    return TB, B_pad


def _actor_kernel(x_ref, w1_ref, b1_ref, w2_ref, b2_ref, w3_ref, b3_ref,
                  noise_ref, out_ref, *, action_dim, pack_single):
    f32 = jnp.float32
    bf16 = jnp.bfloat16

    # ---- MLP: obs -> h1 -> h2 -> 2*LANE (bf16 MXU inputs, f32 accumulation) ----
    x = x_ref[...]                                                       # bf16
    h1 = jnp.dot(x, w1_ref[...], preferred_element_type=f32) + b1_ref[...]
    h1 = jnp.maximum(h1, 0.0).astype(bf16)
    h2 = jnp.dot(h1, w2_ref[...], preferred_element_type=f32) + b2_ref[...]
    h2 = jnp.maximum(h2, 0.0).astype(bf16)
    out = jnp.dot(h2, w3_ref[...], preferred_element_type=f32) + b3_ref[...]

    # ---- split into means / log_stds (128-lane-aligned halves, zero-cost views) ----
    means = out[:, :LANE]
    log_stds_raw = out[:, LANE:]

    log_stds = jnp.tanh(log_stds_raw)
    log_stds = LOG_STD_MIN + 0.5 * (LOG_STD_MAX - LOG_STD_MIN) * (log_stds + 1.0)
    stds = jnp.exp(log_stds)

    # ---- TransformedDistribution(Normal(0,1), [Affine(mean,std,ev=1), Tanh]) ----
    z = noise_ref[...]                                                   # f32
    x_pre = means + stds * z
    samples = jnp.tanh(x_pre)
    tanh_means = jnp.tanh(means)

    log2 = f32(0.6931471805599453)
    log2pi = f32(1.8378770664093453)
    base_lp = -0.5 * z * z - 0.5 * log2pi
    # stable log(1 - tanh(x)^2) = 2*(log 2 - x - softplus(-2x))
    tanh_ladj = 2.0 * (log2 - x_pre - jax.nn.softplus(-2.0 * x_pre))
    per_lane = base_lp - log_stds - tanh_ladj

    lane = jax.lax.broadcasted_iota(jnp.int32, (samples.shape[0], LANE), 1)
    valid = lane < action_dim
    log_prob = jnp.sum(jnp.where(valid, per_lane, 0.0), axis=-1, keepdims=True)

    if pack_single:
        # ---- pack sample|tanh(mean)|log_std|log_prob into ONE 128-lane group ----
        # Lane shifts via static permutation matmuls: (x @ S_k)[:, j] = x[:, j-k].
        a = action_dim
        row = jax.lax.broadcasted_iota(jnp.int32, (LANE, LANE), 0)
        col = jax.lax.broadcasted_iota(jnp.int32, (LANE, LANE), 1)
        shift_a = (col == row + a).astype(f32)
        shift_2a = (col == row + 2 * a).astype(f32)

        means_m = jnp.where(valid, tanh_means, 0.0)
        lstd_m = jnp.where(valid, log_stds, 0.0)

        packed = jnp.where(valid, samples, 0.0)
        packed = packed + jnp.dot(means_m, shift_a, preferred_element_type=f32)
        packed = packed + jnp.dot(lstd_m, shift_2a, preferred_element_type=f32)
        packed = jnp.where(lane == 3 * a, log_prob, packed)
        out_ref[...] = packed
    else:
        # Fallback layout for very large action_dim (> 42): four 128-lane groups.
        out_ref[:, 0 * LANE:1 * LANE] = samples
        out_ref[:, 1 * LANE:2 * LANE] = tanh_means
        out_ref[:, 2 * LANE:3 * LANE] = log_stds
        out_ref[:, 3 * LANE:4 * LANE] = jnp.broadcast_to(log_prob, samples.shape)


def actor_forward(states, params, noise, action_dim, block_batch=1024):
    """states: [B, obs_dim] f32, noise: [B, action_dim] f32 (rsample epsilon).

    Returns dict mirroring the torch module (minus 'dist').
    """
    B, obs_dim = states.shape
    assert action_dim <= LANE, "kernel layout assumes action_dim <= 128"
    (w1, b1), (w2, b2), (w3, b3) = params
    h1d, h2d = w1.shape[1], w2.shape[1]
    h1p, h2p = _round_up(h1d, LANE), _round_up(h2d, LANE)

    pack_single = (3 * action_dim + 1) <= LANE
    out_lanes = LANE if pack_single else 4 * LANE

    TB, B_pad = _choose_tiling(B, obs_dim, h1p, h2p, out_lanes, block_batch)
    grid = (B_pad // TB,)

    bf16 = jnp.bfloat16
    # ---- pad / cast inputs (bf16 states; noise stays f32 for log_prob accuracy) ----
    # TODO(synk): noise could be generated in-kernel (pltpu.prng_*) if the external
    # epsilon contract is dropped; kept external to mirror rsample() semantics.
    states_p = jnp.zeros((B_pad, obs_dim), bf16).at[:B].set(states.astype(bf16))
    noise_p = jnp.zeros((B_pad, LANE), jnp.float32).at[:B, :action_dim].set(noise)

    # ---- pad weights: hidden dims lane-dense, final layer mean|log_std per 128-lane group ----
    w1_p = jnp.zeros((obs_dim, h1p), bf16).at[:, :h1d].set(w1.astype(bf16))
    b1_p = jnp.zeros((1, h1p), jnp.float32).at[0, :h1d].set(b1)
    w2_p = jnp.zeros((h1p, h2p), bf16).at[:h1d, :h2d].set(w2.astype(bf16))
    b2_p = jnp.zeros((1, h2p), jnp.float32).at[0, :h2d].set(b2)
    w3_p = jnp.zeros((h2p, 2 * LANE), bf16)
    w3_p = w3_p.at[:h2d, :action_dim].set(w3[:, :action_dim].astype(bf16))
    w3_p = w3_p.at[:h2d, LANE:LANE + action_dim].set(w3[:, action_dim:].astype(bf16))
    b3_p = jnp.zeros((1, 2 * LANE), jnp.float32)
    b3_p = b3_p.at[0, :action_dim].set(b3[:action_dim])
    b3_p = b3_p.at[0, LANE:LANE + action_dim].set(b3[action_dim:])

    kernel = functools.partial(_actor_kernel, action_dim=action_dim,
                               pack_single=pack_single)

    flops = 2 * B_pad * (obs_dim * h1p + h1p * h2p + h2p * 2 * LANE)
    if pack_single:
        flops += 2 * 2 * B_pad * LANE * LANE          # lane-permutation matmuls
    transcendentals = 6 * B_pad * LANE                # tanh x3, exp, softplus(exp+log1p)
    bytes_accessed = (B_pad * obs_dim * 2 + B_pad * LANE * 4 + B_pad * out_lanes * 4
                      + (obs_dim * h1p + h1p * h2p + h2p * 2 * LANE) * 2
                      + (h1p + h2p + 2 * LANE) * 4)

    vmem_limit = int(min(48 * 1024 * 1024,
                         max(32 * 1024 * 1024,
                             2 * _vmem_footprint(TB, obs_dim, h1p, h2p, out_lanes))))

    def run(single_buffer_weights):
        # Constant-index weight/bias blocks don't need double buffering.
        const_kw = ({"pipeline_mode": pl.Buffered(1)} if single_buffer_weights else {})
        in_specs = [
            pl.BlockSpec((TB, obs_dim), lambda i: (i, 0)),               # states (batch-tiled)
            pl.BlockSpec((obs_dim, h1p), lambda i: (0, 0), **const_kw),  # w1
            pl.BlockSpec((1, h1p), lambda i: (0, 0), **const_kw),        # b1
            pl.BlockSpec((h1p, h2p), lambda i: (0, 0), **const_kw),      # w2
            pl.BlockSpec((1, h2p), lambda i: (0, 0), **const_kw),        # b2
            pl.BlockSpec((h2p, 2 * LANE), lambda i: (0, 0), **const_kw), # w3 (lane-padded)
            pl.BlockSpec((1, 2 * LANE), lambda i: (0, 0), **const_kw),   # b3 (lane-padded)
            pl.BlockSpec((TB, LANE), lambda i: (i, 0)),                  # noise (batch-tiled)
        ]
        return pl.pallas_call(
            kernel,
            out_shape=jax.ShapeDtypeStruct((B_pad, out_lanes), jnp.float32),
            grid_spec=pltpu.PrefetchScalarGridSpec(
                num_scalar_prefetch=0,
                grid=grid,
                in_specs=in_specs,
                out_specs=pl.BlockSpec((TB, out_lanes), lambda i: (i, 0)),
            ),
            compiler_params=pltpu.CompilerParams(
                dimension_semantics=("parallel",),
                vmem_limit_bytes=vmem_limit,
            ),
            cost_estimate=pl.CostEstimate(
                flops=flops, transcendentals=transcendentals,
                bytes_accessed=bytes_accessed),
        )(states_p, w1_p, b1_p, w2_p, b2_p, w3_p, b3_p, noise_p)

    try:
        out_slab = run(True)
    except Exception:
        # Older/newer JAX builds that reject pipeline_mode fall back to default
        # double-buffered weight blocks (correctness identical).
        out_slab = run(False)

    # ---- unpack (free layout plumbing in the wrapper) ----
    a = action_dim
    if pack_single:
        sample = out_slab[:B, 0:a]
        mean = out_slab[:B, a:2 * a]
        log_std = out_slab[:B, 2 * a:3 * a]
        log_prob = out_slab[:B, 3 * a]
    else:
        sample = out_slab[:B, 0:a]
        mean = out_slab[:B, LANE:LANE + a]
        log_std = out_slab[:B, 2 * LANE:2 * LANE + a]
        log_prob = out_slab[:B, 3 * LANE]

    return {
        "sample": sample,
        "mean": mean,
        "log_std": log_std,
        "log_prob": log_prob,
        # TODO(synk): 'dist' (a torch Distribution object) has no array equivalent here.
    }


def _reference_forward(states, params, noise, action_dim):
    """Pure-JAX reference of the torch Actor.forward (bf16 matmul path mirrored)."""
    (w1, b1), (w2, b2), (w3, b3) = params
    bf16 = jnp.bfloat16
    f32 = jnp.float32
    h1 = jnp.maximum(jnp.dot(states.astype(bf16), w1.astype(bf16),
                             preferred_element_type=f32) + b1, 0.0)
    h2 = jnp.maximum(jnp.dot(h1.astype(bf16), w2.astype(bf16),
                             preferred_element_type=f32) + b2, 0.0)
    out = jnp.dot(h2.astype(bf16), w3.astype(bf16), preferred_element_type=f32) + b3
    means = out[:, :action_dim]
    log_stds = jnp.tanh(out[:, action_dim:])
    log_stds = LOG_STD_MIN + 0.5 * (LOG_STD_MAX - LOG_STD_MIN) * (log_stds + 1.0)
    stds = jnp.exp(log_stds)
    x_pre = means + stds * noise
    samples = jnp.tanh(x_pre)
    log2 = 0.6931471805599453
    log2pi = 1.8378770664093453
    base_lp = -0.5 * noise * noise - 0.5 * log2pi
    tanh_ladj = 2.0 * (log2 - x_pre - jax.nn.softplus(-2.0 * x_pre))
    log_prob = jnp.sum(base_lp - log_stds - tanh_ladj, axis=-1)
    return {"sample": samples, "mean": jnp.tanh(means),
            "log_std": log_stds, "log_prob": log_prob}


def init_params(key, obs_dim, hidden_dims, action_dim):
    """Deterministic small-scale init (uniform fan-in, like nn.Linear default)."""
    dims = [obs_dim] + list(hidden_dims) + [2 * action_dim]
    params = []
    for i in range(len(dims) - 1):
        key, kw, kb = jax.random.split(key, 3)
        bound = 1.0 / jnp.sqrt(jnp.float32(dims[i]))
        w = jax.random.uniform(kw, (dims[i], dims[i + 1]),
                               minval=-bound, maxval=bound, dtype=jnp.float32)
        b = jax.random.uniform(kb, (dims[i + 1],),
                               minval=-bound, maxval=bound, dtype=jnp.float32)
        params.append((w, b))
    return params


if __name__ == "__main__":
    B = 8
    OBS_DIM = 32
    HIDDEN = (32, 32)
    ACTION_DIM = 4

    key = jax.random.PRNGKey(0)
    k_states, k_noise, k_params = jax.random.split(key, 3)

    states = jax.random.normal(k_states, (B, OBS_DIM), dtype=jnp.float32)
    noise = jax.random.normal(k_noise, (B, ACTION_DIM), dtype=jnp.float32)  # rsample eps
    params = init_params(k_params, OBS_DIM, HIDDEN, ACTION_DIM)

    out = actor_forward(states, params, noise, ACTION_DIM)
    jax.block_until_ready(out)

    assert out["sample"].shape == (B, ACTION_DIM)
    assert out["mean"].shape == (B, ACTION_DIM)
    assert out["log_std"].shape == (B, ACTION_DIM)
    assert out["log_prob"].shape == (B,)

    ref = _reference_forward(states, params, noise, ACTION_DIM)
    tol = {"sample": 2e-3, "mean": 2e-3, "log_std": 2e-3, "log_prob": 5e-3}
    for name in ("sample", "mean", "log_std", "log_prob"):
        err = float(jnp.max(jnp.abs(out[name] - ref[name])))
        assert err < tol[name], f"{name} mismatch: max abs err {err}"

    print("KERNEL_OK")
</pallas_src>

<mosaic_0001>
module attributes {stable_mosaic.version = 11 : i64} {
  func.func @_actor_kernel(%arg0: i32, %arg1: memref<16x32xbf16, #tpu.memory_space<vmem>>, %arg2: memref<32x128xbf16, #tpu.memory_space<vmem>>, %arg3: memref<1x128xf32, #tpu.memory_space<vmem>>, %arg4: memref<128x128xbf16, #tpu.memory_space<vmem>>, %arg5: memref<1x128xf32, #tpu.memory_space<vmem>>, %arg6: memref<128x256xbf16, #tpu.memory_space<vmem>>, %arg7: memref<1x256xf32, #tpu.memory_space<vmem>>, %arg8: memref<16x128xf32, #tpu.memory_space<vmem>>, %arg9: memref<16x128xf32, #tpu.memory_space<vmem>>) attributes {dimension_semantics = [#tpu.dimension_semantics<parallel>], iteration_bounds = array<i64: 1>, scalar_prefetch = 0 : i64, scratch_operands = 0 : i64, tpu.core_type = #tpu.core_type<tc>, window_params = [{transform_indices = @transform_0, window_bounds = array<i64: 16, 32>}, {pipeline_mode = #tpu.pipeline_mode<synchronous>, transform_indices = @transform_1, window_bounds = array<i64: 32, 128>}, {pipeline_mode = #tpu.pipeline_mode<synchronous>, transform_indices = @transform_2, window_bounds = array<i64: 1, 128>}, {pipeline_mode = #tpu.pipeline_mode<synchronous>, transform_indices = @transform_3, window_bounds = array<i64: 128, 128>}, {pipeline_mode = #tpu.pipeline_mode<synchronous>, transform_indices = @transform_4, window_bounds = array<i64: 1, 128>}, {pipeline_mode = #tpu.pipeline_mode<synchronous>, transform_indices = @transform_5, window_bounds = array<i64: 128, 256>}, {pipeline_mode = #tpu.pipeline_mode<synchronous>, transform_indices = @transform_6, window_bounds = array<i64: 1, 256>}, {transform_indices = @transform_7, window_bounds = array<i64: 16, 128>}, {transform_indices = @transform_8, window_bounds = array<i64: 16, 128>}]} {
    %c0 = arith.constant 0 : index
    %c0_0 = arith.constant 0 : index
    %0 = vector.load %arg1[%c0, %c0_0] : memref<16x32xbf16, #tpu.memory_space<vmem>>, vector<16x32xbf16>
    %c0_1 = arith.constant 0 : index
    %c0_2 = arith.constant 0 : index
    %1 = vector.load %arg2[%c0_1, %c0_2] : memref<32x128xbf16, #tpu.memory_space<vmem>>, vector<32x128xbf16>
    %cst = arith.constant dense<0.000000e+00> : vector<16x128xf32>
    %2 = tpu.matmul %0, %1, %cst {dimension_numbers = #tpu.dot_dimension_numbers<[1], [0], [0], [1], [0, 0, 1, 1], [], []>} : vector<16x32xbf16>, vector<32x128xbf16>, vector<16x128xf32> -> vector<16x128xf32>
    %c0_3 = arith.constant 0 : index
    %c0_4 = arith.constant 0 : index
    %3 = vector.load %arg3[%c0_3, %c0_4] : memref<1x128xf32, #tpu.memory_space<vmem>>, vector<1x128xf32>
    %4 = vector.broadcast %3 : vector<1x128xf32> to vector<16x128xf32>
    %5 = arith.addf %2, %4 : vector<16x128xf32>
    %cst_5 = arith.constant 0.000000e+00 : f32
    %6 = vector.broadcast %cst_5 : f32 to vector<16x128xf32>
    %7 = arith.maximumf %5, %6 : vector<16x128xf32>
    %8 = arith.truncf %7 : vector<16x128xf32> to vector<16x128xbf16>
    %c0_6 = arith.constant 0 : index
    %c0_7 = arith.constant 0 : index
    %9 = vector.load %arg4[%c0_6, %c0_7] : memref<128x128xbf16, #tpu.memory_space<vmem>>, vector<128x128xbf16>
    %cst_8 = arith.constant dense<0.000000e+00> : vector<16x128xf32>
    %10 = tpu.matmul %8, %9, %cst_8 {dimension_numbers = #tpu.dot_dimension_numbers<[1], [0], [0], [1], [0, 0, 1, 1], [], []>} : vector<16x128xbf16>, vector<128x128xbf16>, vector<16x128xf32> -> vector<16x128xf32>
    %c0_9 = arith.constant 0 : index
    %c0_10 = arith.constant 0 : index
    %11 = vector.load %arg5[%c0_9, %c0_10] : memref<1x128xf32, #tpu.memory_space<vmem>>, vector<1x128xf32>
    %12 = vector.broadcast %11 : vector<1x128xf32> to vector<16x128xf32>
    %13 = arith.addf %10, %12 : vector<16x128xf32>
    %cst_11 = arith.constant 0.000000e+00 : f32
    %14 = vector.broadcast %cst_11 : f32 to vector<16x128xf32>
    %15 = arith.maximumf %13, %14 : vector<16x128xf32>
    %16 = arith.truncf %15 : vector<16x128xf32> to vector<16x128xbf16>
    %c0_12 = arith.constant 0 : index
    %c0_13 = arith.constant 0 : index
    %17 = vector.load %arg6[%c0_12, %c0_13] : memref<128x256xbf16, #tpu.memory_space<vmem>>, vector<128x256xbf16>
    %cst_14 = arith.constant dense<0.000000e+00> : vector<16x256xf32>
    %18 = tpu.matmul %16, %17, %cst_14 {dimension_numbers = #tpu.dot_dimension_numbers<[1], [0], [0], [1], [0, 0, 1, 1], [], []>} : vector<16x128xbf16>, vector<128x256xbf16>, vector<16x256xf32> -> vector<16x256xf32>
    %c0_15 = arith.constant 0 : index
    %c0_16 = arith.constant 0 : index
    %19 = vector.load %arg7[%c0_15, %c0_16] : memref<1x256xf32, #tpu.memory_space<vmem>>, vector<1x256xf32>
    %20 = vector.broadcast %19 : vector<1x256xf32> to vector<16x256xf32>
    %21 = arith.addf %18, %20 : vector<16x256xf32>
    %22 = vector.extract_strided_slice %21 {offsets = [0, 0], sizes = [16, 128], strides = [1, 1]} : vector<16x256xf32> to vector<16x128xf32>
    %23 = vector.extract_strided_slice %21 {offsets = [0, 128], sizes = [16, 128], strides = [1, 1]} : vector<16x256xf32> to vector<16x128xf32>
    %24 = math.tanh %23 : vector<16x128xf32>
    %cst_17 = arith.constant 1.000000e+00 : f32
    %25 = vector.broadcast %cst_17 : f32 to vector<16x128xf32>
    %26 = arith.addf %24, %25 : vector<16x128xf32>
    %cst_18 = arith.constant 3.500000e+00 : f32
    %27 = vector.broadcast %cst_18 : f32 to vector<16x128xf32>
    %28 = arith.mulf %27, %26 : vector<16x128xf32>
    %cst_19 = arith.constant -5.000000e+00 : f32
    %29 = vector.broadcast %cst_19 : f32 to vector<16x128xf32>
    %30 = arith.addf %29, %28 : vector<16x128xf32>
    %31 = math.exp %30 : vector<16x128xf32>
    %c0_20 = arith.constant 0 : index
    %c0_21 = arith.constant 0 : index
    %32 = vector.load %arg8[%c0_20, %c0_21] : memref<16x128xf32, #tpu.memory_space<vmem>>, vector<16x128xf32>
    %33 = arith.mulf %31, %32 : vector<16x128xf32>
    %34 = arith.addf %22, %33 : vector<16x128xf32>
    %35 = math.tanh %34 : vector<16x128xf32>
    %36 = math.tanh %22 : vector<16x128xf32>
    %cst_22 = arith.constant -5.000000e-01 : f32
    %37 = vector.broadcast %cst_22 : f32 to vector<16x128xf32>
    %38 = arith.mulf %37, %32 : vector<16x128xf32>
    %39 = arith.mulf %38, %32 : vector<16x128xf32>
    %cst_23 = arith.constant 5.000000e-01 : f32
    %cst_24 = arith.constant 1.83787704 : f32
    %40 = arith.mulf %cst_23, %cst_24 : f32
    %41 = vector.broadcast %40 : f32 to vector<16x128xf32>
    %42 = arith.subf %39, %41 : vector<16x128xf32>
    %cst_25 = arith.constant 0.693147182 : f32
    %43 = vector.broadcast %cst_25 : f32 to vector<16x128xf32>
    %44 = arith.subf %43, %34 : vector<16x128xf32>
    %cst_26 = arith.constant -2.000000e+00 : f32
    %45 = vector.broadcast %cst_26 : f32 to vector<16x128xf32>
    %46 = arith.mulf %45, %34 : vector<16x128xf32>
    %cst_27 = arith.constant 0.000000e+00 : f32
    %47 = vector.broadcast %cst_27 : f32 to vector<16x128xf32>
    %48 = arith.maximumf %46, %47 : vector<16x128xf32>
    %49 = vector.broadcast %cst_27 : f32 to vector<16x128xf32>
    %50 = arith.subf %46, %49 : vector<16x128xf32>
    %51 = arith.cmpf one, %50, %50 : vector<16x128xf32>
    %52 = vector.broadcast %cst_27 : f32 to vector<16x128xf32>
    %53 = arith.addf %46, %52 : vector<16x128xf32>
    %54 = math.absf %50 : vector<16x128xf32>
    %cst_28 = arith.constant 0.000000e+00 : f32
    %55 = vector.broadcast %cst_28 : f32 to vector<16x128xf32>
    %56 = arith.subf %55, %54 : vector<16x128xf32>
    %57 = math.exp %56 : vector<16x128xf32>
    %58 = math.log1p %57 : vector<16x128xf32>
    %59 = arith.addf %48, %58 : vector<16x128xf32>
    %60 = arith.select %51, %53, %59 : vector<16x128xi1>, vector<16x128xf32>
    %61 = arith.subf %44, %60 : vector<16x128xf32>
    %cst_29 = arith.constant 2.000000e+00 : f32
    %62 = vector.broadcast %cst_29 : f32 to vector<16x128xf32>
    %63 = arith.mulf %62, %61 : vector<16x128xf32>
    %64 = arith.subf %42, %30 : vector<16x128xf32>
    %65 = arith.subf %64, %63 : vector<16x128xf32>
    %66 = tpu.iota {dimensions = array<i32: 1>} : vector<16x128xi32>
    %c4_i32 = arith.constant 4 : i32
    %67 = vector.broadcast %c4_i32 : i32 to vector<16x128xi32>
    %68 = arith.cmpi slt, %66, %67 : vector<16x128xi32>
    %cst_30 = arith.constant 0.000000e+00 : f32
    %69 = vector.broadcast %cst_30 : f32 to vector<16x128xf32>
    %70 = arith.select %68, %65, %69 : vector<16x128xi1>, vector<16x128xf32>
    %cst_31 = arith.constant dense<0.000000e+00> : vector<16xf32>
    %71 = vector.multi_reduction <add>, %70, %cst_31 [1] : vector<16x128xf32> to vector<16xf32>
    %72 = vector.shape_cast %71 : vector<16xf32> to vector<16x1xf32>
    %73 = tpu.iota {dimensions = array<i32: 0>} : vector<128x128xi32>
    %74 = tpu.iota {dimensions = array<i32: 1>} : vector<128x128xi32>
    %c4_i32_32 = arith.constant 4 : i32
    %75 = vector.broadcast %c4_i32_32 : i32 to vector<128x128xi32>
    %76 = arith.addi %73, %75 : vector<128x128xi32>
    %77 = arith.cmpi eq, %74, %76 : vector<128x128xi32>
    %78 = arith.extui %77 : vector<128x128xi1> to vector<128x128xi32>
    %79 = arith.sitofp %78 : vector<128x128xi32> to vector<128x128xf32>
    %c8_i32 = arith.constant 8 : i32
    %80 = vector.broadcast %c8_i32 : i32 to vector<128x128xi32>
    %81 = arith.addi %73, %80 : vector<128x128xi32>
    %82 = arith.cmpi eq, %74, %81 : vector<128x128xi32>
    %83 = arith.extui %82 : vector<128x128xi1> to vector<128x128xi32>
    %84 = arith.sitofp %83 : vector<128x128xi32> to vector<128x128xf32>
    %cst_33 = arith.constant 0.000000e+00 : f32
    %85 = vector.broadcast %cst_33 : f32 to vector<16x128xf32>
    %86 = arith.select %68, %36, %85 : vector<16x128xi1>, vector<16x128xf32>
    %cst_34 = arith.constant 0.000000e+00 : f32
    %87 = vector.broadcast %cst_34 : f32 to vector<16x128xf32>
    %88 = arith.select %68, %30, %87 : vector<16x128xi1>, vector<16x128xf32>
    %cst_35 = arith.constant 0.000000e+00 : f32
    %89 = vector.broadcast %cst_35 : f32 to vector<16x128xf32>
    %90 = arith.select %68, %35, %89 : vector<16x128xi1>, vector<16x128xf32>
    %cst_36 = arith.constant dense<0.000000e+00> : vector<16x128xf32>
    %91 = tpu.matmul %86, %79, %cst_36 {dimension_numbers = #tpu.dot_dimension_numbers<[1], [0], [0], [1], [0, 0, 1, 1], [], []>} : vector<16x128xf32>, vector<128x128xf32>, vector<16x128xf32> -> vector<16x128xf32>
    %92 = arith.addf %90, %91 : vector<16x128xf32>
    %cst_37 = arith.constant dense<0.000000e+00> : vector<16x128xf32>
    %93 = tpu.matmul %88, %84, %cst_37 {dimension_numbers = #tpu.dot_dimension_numbers<[1], [0], [0], [1], [0, 0, 1, 1], [], []>} : vector<16x128xf32>, vector<128x128xf32>, vector<16x128xf32> -> vector<16x128xf32>
    %94 = arith.addf %92, %93 : vector<16x128xf32>
    %c12_i32 = arith.constant 12 : i32
    %95 = vector.broadcast %c12_i32 : i32 to vector<16x128xi32>
    %96 = arith.cmpi eq, %66, %95 : vector<16x128xi32>
    %97 = vector.shape_cast %72 : vector<16x1xf32> to vector<16x1xf32>
    %98 = vector.broadcast %97 : vector<16x1xf32> to vector<16x128xf32>
    %99 = arith.select %96, %98, %94 : vector<16x128xi1>, vector<16x128xf32>
    %c0_38 = arith.constant 0 : index
    %c0_39 = arith.constant 0 : index
    %100 = vector.load %arg9[%c0_38, %c0_39] : memref<16x128xf32, #tpu.memory_space<vmem>>, vector<16x128xf32>
    tpu.vector_store %arg9[%c0_38, %c0_39], %99 {strides = array<i32>} : memref<16x128xf32, #tpu.memory_space<vmem>>, vector<16x128xf32>,
    return
  }
  func.func @transform_0(%arg0: i32) -> (i32, i32) {
    %c0_i32 = arith.constant 0 : i32
    %c0_i32_0 = arith.constant 0 : i32
    return %arg0, %c0_i32 : i32, i32
  }
  func.func @transform_1(%arg0: i32) -> (i32, i32) {
    %c0_i32 = arith.constant 0 : i32
    %c0_i32_0 = arith.constant 0 : i32
    %c0_i32_1 = arith.constant 0 : i32
    return %c0_i32, %c0_i32_0 : i32, i32
  }
  func.func @transform_2(%arg0: i32) -> (i32, i32) {
    %c0_i32 = arith.constant 0 : i32
    %c0_i32_0 = arith.constant 0 : i32
    %c0_i32_1 = arith.constant 0 : i32
    return %c0_i32, %c0_i32_0 : i32, i32
  }
  func.func @transform_3(%arg0: i32) -> (i32, i32) {
    %c0_i32 = arith.constant 0 : i32
    %c0_i32_0 = arith.constant 0 : i32
    %c0_i32_1 = arith.constant 0 : i32
    return %c0_i32, %c0_i32_0 : i32, i32
  }
  func.func @transform_4(%arg0: i32) -> (i32, i32) {
    %c0_i32 = arith.constant 0 : i32
    %c0_i32_0 = arith.constant 0 : i32
    %c0_i32_1 = arith.constant 0 : i32
    return %c0_i32, %c0_i32_0 : i32, i32
  }
  func.func @transform_5(%arg0: i32) -> (i32, i32) {
    %c0_i32 = arith.constant 0 : i32
    %c0_i32_0 = arith.constant 0 : i32
    %c0_i32_1 = arith.constant 0 : i32
    return %c0_i32, %c0_i32_0 : i32, i32
  }
  func.func @transform_6(%arg0: i32) -> (i32, i32) {
    %c0_i32 = arith.constant 0 : i32
    %c0_i32_0 = arith.constant 0 : i32
    %c0_i32_1 = arith.constant 0 : i32
    return %c0_i32, %c0_i32_0 : i32, i32
  }
  func.func @transform_7(%arg0: i32) -> (i32, i32) {
    %c0_i32 = arith.constant 0 : i32
    %c0_i32_0 = arith.constant 0 : i32
    return %arg0, %c0_i32 : i32, i32
  }
  func.func @transform_8(%arg0: i32) -> (i32, i32) {
    %c0_i32 = arith.constant 0 : i32
    %c0_i32_0 = arith.constant 0 : i32
    return %arg0, %c0_i32 : i32, i32
  }
}

module attributes {stable_mosaic.version = 11 : i64} {
  func.func @_actor_kernel(%arg0: i32, %arg1: memref<16x32xbf16, #tpu.memory_space<vmem>>, %arg2: memref<32x128xbf16, #tpu.memory_space<vmem>>, %arg3: memref<1x128xf32, #tpu.memory_space<vmem>>, %arg4: memref<128x128xbf16, #tpu.memory_space<vmem>>, %arg5: memref<1x128xf32, #tpu.memory_space<vmem>>, %arg6: memref<128x256xbf16, #tpu.memory_space<vmem>>, %arg7: memref<1x256xf32, #tpu.memory_space<vmem>>, %arg8: memref<16x128xf32, #tpu.memory_space<vmem>>, %arg9: memref<16x128xf32, #tpu.memory_space<vmem>>) attributes {dimension_semantics = [#tpu.dimension_semantics<parallel>], iteration_bounds = array<i64: 1>, scalar_prefetch = 0 : i64, scratch_operands = 0 : i64, tpu.core_type = #tpu.core_type<tc>, window_params = [{transform_indices = @transform_0, window_bounds = array<i64: 16, 32>}, {pipeline_mode = #tpu.pipeline_mode<synchronous>, transform_indices = @transform_1, window_bounds = array<i64: 32, 128>}, {pipeline_mode = #tpu.pipeline_mode<synchronous>, transform_indices = @transform_2, window_bounds = array<i64: 1, 128>}, {pipeline_mode = #tpu.pipeline_mode<synchronous>, transform_indices = @transform_3, window_bounds = array<i64: 128, 128>}, {pipeline_mode = #tpu.pipeline_mode<synchronous>, transform_indices = @transform_4, window_bounds = array<i64: 1, 128>}, {pipeline_mode = #tpu.pipeline_mode<synchronous>, transform_indices = @transform_5, window_bounds = array<i64: 128, 256>}, {pipeline_mode = #tpu.pipeline_mode<synchronous>, transform_indices = @transform_6, window_bounds = array<i64: 1, 256>}, {transform_indices = @transform_7, window_bounds = array<i64: 16, 128>}, {transform_indices = @transform_8, window_bounds = array<i64: 16, 128>}]} {
    %c0 = arith.constant 0 : index
    %c0_0 = arith.constant 0 : index
    %0 = vector.load %arg1[%c0, %c0_0] : memref<16x32xbf16, #tpu.memory_space<vmem>>, vector<16x32xbf16>
    %c0_1 = arith.constant 0 : index
    %c0_2 = arith.constant 0 : index
    %1 = vector.load %arg2[%c0_1, %c0_2] : memref<32x128xbf16, #tpu.memory_space<vmem>>, vector<32x128xbf16>
    %cst = arith.constant dense<0.000000e+00> : vector<16x128xf32>
    %2 = tpu.matmul %0, %1, %cst {dimension_numbers = #tpu.dot_dimension_numbers<[1], [0], [0], [1], [0, 0, 1, 1], [], []>} : vector<16x32xbf16>, vector<32x128xbf16>, vector<16x128xf32> -> vector<16x128xf32>
    %c0_3 = arith.constant 0 : index
    %c0_4 = arith.constant 0 : index
    %3 = vector.load %arg3[%c0_3, %c0_4] : memref<1x128xf32, #tpu.memory_space<vmem>>, vector<1x128xf32>
    %4 = vector.broadcast %3 : vector<1x128xf32> to vector<16x128xf32>
    %5 = arith.addf %2, %4 : vector<16x128xf32>
    %cst_5 = arith.constant 0.000000e+00 : f32
    %6 = vector.broadcast %cst_5 : f32 to vector<16x128xf32>
    %7 = arith.maximumf %5, %6 : vector<16x128xf32>
    %8 = arith.truncf %7 : vector<16x128xf32> to vector<16x128xbf16>
    %c0_6 = arith.constant 0 : index
    %c0_7 = arith.constant 0 : index
    %9 = vector.load %arg4[%c0_6, %c0_7] : memref<128x128xbf16, #tpu.memory_space<vmem>>, vector<128x128xbf16>
    %cst_8 = arith.constant dense<0.000000e+00> : vector<16x128xf32>
    %10 = tpu.matmul %8, %9, %cst_8 {dimension_numbers = #tpu.dot_dimension_numbers<[1], [0], [0], [1], [0, 0, 1, 1], [], []>} : vector<16x128xbf16>, vector<128x128xbf16>, vector<16x128xf32> -> vector<16x128xf32>
    %c0_9 = arith.constant 0 : index
    %c0_10 = arith.constant 0 : index
    %11 = vector.load %arg5[%c0_9, %c0_10] : memref<1x128xf32, #tpu.memory_space<vmem>>, vector<1x128xf32>
    %12 = vector.broadcast %11 : vector<1x128xf32> to vector<16x128xf32>
    %13 = arith.addf %10, %12 : vector<16x128xf32>
    %cst_11 = arith.constant 0.000000e+00 : f32
    %14 = vector.broadcast %cst_11 : f32 to vector<16x128xf32>
    %15 = arith.maximumf %13, %14 : vector<16x128xf32>
    %16 = arith.truncf %15 : vector<16x128xf32> to vector<16x128xbf16>
    %c0_12 = arith.constant 0 : index
    %c0_13 = arith.constant 0 : index
    %17 = vector.load %arg6[%c0_12, %c0_13] : memref<128x256xbf16, #tpu.memory_space<vmem>>, vector<128x256xbf16>
    %cst_14 = arith.constant dense<0.000000e+00> : vector<16x256xf32>
    %18 = tpu.matmul %16, %17, %cst_14 {dimension_numbers = #tpu.dot_dimension_numbers<[1], [0], [0], [1], [0, 0, 1, 1], [], []>} : vector<16x128xbf16>, vector<128x256xbf16>, vector<16x256xf32> -> vector<16x256xf32>
    %c0_15 = arith.constant 0 : index
    %c0_16 = arith.constant 0 : index
    %19 = vector.load %arg7[%c0_15, %c0_16] : memref<1x256xf32, #tpu.memory_space<vmem>>, vector<1x256xf32>
    %20 = vector.broadcast %19 : vector<1x256xf32> to vector<16x256xf32>
    %21 = arith.addf %18, %20 : vector<16x256xf32>
    %22 = vector.extract_strided_slice %21 {offsets = [0, 0], sizes = [16, 128], strides = [1, 1]} : vector<16x256xf32> to vector<16x128xf32>
    %23 = vector.extract_strided_slice %21 {offsets = [0, 128], sizes = [16, 128], strides = [1, 1]} : vector<16x256xf32> to vector<16x128xf32>
    %24 = math.tanh %23 : vector<16x128xf32>
    %cst_17 = arith.constant 1.000000e+00 : f32
    %25 = vector.broadcast %cst_17 : f32 to vector<16x128xf32>
    %26 = arith.addf %24, %25 : vector<16x128xf32>
    %cst_18 = arith.constant 3.500000e+00 : f32
    %27 = vector.broadcast %cst_18 : f32 to vector<16x128xf32>
    %28 = arith.mulf %27, %26 : vector<16x128xf32>
    %cst_19 = arith.constant -5.000000e+00 : f32
    %29 = vector.broadcast %cst_19 : f32 to vector<16x128xf32>
    %30 = arith.addf %29, %28 : vector<16x128xf32>
    %31 = math.exp %30 : vector<16x128xf32>
    %c0_20 = arith.constant 0 : index
    %c0_21 = arith.constant 0 : index
    %32 = vector.load %arg8[%c0_20, %c0_21] : memref<16x128xf32, #tpu.memory_space<vmem>>, vector<16x128xf32>
    %33 = arith.mulf %31, %32 : vector<16x128xf32>
    %34 = arith.addf %22, %33 : vector<16x128xf32>
    %35 = math.tanh %34 : vector<16x128xf32>
    %36 = math.tanh %22 : vector<16x128xf32>
    %cst_22 = arith.constant -5.000000e-01 : f32
    %37 = vector.broadcast %cst_22 : f32 to vector<16x128xf32>
    %38 = arith.mulf %37, %32 : vector<16x128xf32>
    %39 = arith.mulf %38, %32 : vector<16x128xf32>
    %cst_23 = arith.constant 5.000000e-01 : f32
    %cst_24 = arith.constant 1.83787704 : f32
    %40 = arith.mulf %cst_23, %cst_24 : f32
    %41 = vector.broadcast %40 : f32 to vector<16x128xf32>
    %42 = arith.subf %39, %41 : vector<16x128xf32>
    %cst_25 = arith.constant 0.693147182 : f32
    %43 = vector.broadcast %cst_25 : f32 to vector<16x128xf32>
    %44 = arith.subf %43, %34 : vector<16x128xf32>
    %cst_26 = arith.constant -2.000000e+00 : f32
    %45 = vector.broadcast %cst_26 : f32 to vector<16x128xf32>
    %46 = arith.mulf %45, %34 : vector<16x128xf32>
    %cst_27 = arith.constant 0.000000e+00 : f32
    %47 = vector.broadcast %cst_27 : f32 to vector<16x128xf32>
    %48 = arith.maximumf %46, %47 : vector<16x128xf32>
    %49 = vector.broadcast %cst_27 : f32 to vector<16x128xf32>
    %50 = arith.subf %46, %49 : vector<16x128xf32>
    %51 = arith.cmpf one, %50, %50 : vector<16x128xf32>
    %52 = vector.broadcast %cst_27 : f32 to vector<16x128xf32>
    %53 = arith.addf %46, %52 : vector<16x128xf32>
    %54 = math.absf %50 : vector<16x128xf32>
    %cst_28 = arith.constant 0.000000e+00 : f32
    %55 = vector.broadcast %cst_28 : f32 to vector<16x128xf32>
    %56 = arith.subf %55, %54 : vector<16x128xf32>
    %57 = math.exp %56 : vector<16x128xf32>
    %58 = math.log1p %57 : vector<16x128xf32>
    %59 = arith.addf %48, %58 : vector<16x128xf32>
    %60 = arith.select %51, %53, %59 : vector<16x128xi1>, vector<16x128xf32>
    %61 = arith.subf %44, %60 : vector<16x128xf32>
    %cst_29 = arith.constant 2.000000e+00 : f32
    %62 = vector.broadcast %cst_29 : f32 to vector<16x128xf32>
    %63 = arith.mulf %62, %61 : vector<16x128xf32>
    %64 = arith.subf %42, %30 : vector<16x128xf32>
    %65 = arith.subf %64, %63 : vector<16x128xf32>
    %66 = tpu.iota {dimensions = array<i32: 1>} : vector<16x128xi32>
    %c4_i32 = arith.constant 4 : i32
    %67 = vector.broadcast %c4_i32 : i32 to vector<16x128xi32>
    %68 = arith.cmpi slt, %66, %67 : vector<16x128xi32>
    %cst_30 = arith.constant 0.000000e+00 : f32
    %69 = vector.broadcast %cst_30 : f32 to vector<16x128xf32>
    %70 = arith.select %68, %65, %69 : vector<16x128xi1>, vector<16x128xf32>
    %cst_31 = arith.constant dense<0.000000e+00> : vector<16xf32>
    %71 = vector.multi_reduction <add>, %70, %cst_31 [1] : vector<16x128xf32> to vector<16xf32>
    %72 = vector.shape_cast %71 : vector<16xf32> to vector<16x1xf32>
    %73 = tpu.iota {dimensions = array<i32: 0>} : vector<128x128xi32>
    %74 = tpu.iota {dimensions = array<i32: 1>} : vector<128x128xi32>
    %c4_i32_32 = arith.constant 4 : i32
    %75 = vector.broadcast %c4_i32_32 : i32 to vector<128x128xi32>
    %76 = arith.addi %73, %75 : vector<128x128xi32>
    %77 = arith.cmpi eq, %74, %76 : vector<128x128xi32>
    %78 = arith.extui %77 : vector<128x128xi1> to vector<128x128xi32>
    %79 = arith.sitofp %78 : vector<128x128xi32> to vector<128x128xf32>
    %c8_i32 = arith.constant 8 : i32
    %80 = vector.broadcast %c8_i32 : i32 to vector<128x128xi32>
    %81 = arith.addi %73, %80 : vector<128x128xi32>
    %82 = arith.cmpi eq, %74, %81 : vector<128x128xi32>
    %83 = arith.extui %82 : vector<128x128xi1> to vector<128x128xi32>
    %84 = arith.sitofp %83 : vector<128x128xi32> to vector<128x128xf32>
    %cst_33 = arith.constant 0.000000e+00 : f32
    %85 = vector.broadcast %cst_33 : f32 to vector<16x128xf32>
    %86 = arith.select %68, %36, %85 : vector<16x128xi1>, vector<16x128xf32>
    %cst_34 = arith.constant 0.000000e+00 : f32
    %87 = vector.broadcast %cst_34 : f32 to vector<16x128xf32>
    %88 = arith.select %68, %30, %87 : vector<16x128xi1>, vector<16x128xf32>
    %cst_35 = arith.constant 0.000000e+00 : f32
    %89 = vector.broadcast %cst_35 : f32 to vector<16x128xf32>
    %90 = arith.select %68, %35, %89 : vector<16x128xi1>, vector<16x128xf32>
    %cst_36 = arith.constant dense<0.000000e+00> : vector<16x128xf32>
    %91 = tpu.matmul %86, %79, %cst_36 {dimension_numbers = #tpu.dot_dimension_numbers<[1], [0], [0], [1], [0, 0, 1, 1], [], []>} : vector<16x128xf32>, vector<128x128xf32>, vector<16x128xf32> -> vector<16x128xf32>
    %92 = arith.addf %90, %91 : vector<16x128xf32>
    %cst_37 = arith.constant dense<0.000000e+00> : vector<16x128xf32>
    %93 = tpu.matmul %88, %84, %cst_37 {dimension_numbers = #tpu.dot_dimension_numbers<[1], [0], [0], [1], [0, 0, 1, 1], [], []>} : vector<16x128xf32>, vector<128x128xf32>, vector<16x128xf32> -> vector<16x128xf32>
    %94 = arith.addf %92, %93 : vector<16x128xf32>
    %c12_i32 = arith.constant 12 : i32
    %95 = vector.broadcast %c12_i32 : i32 to vector<16x128xi32>
    %96 = arith.cmpi eq, %66, %95 : vector<16x128xi32>
    %97 = vector.shape_cast %72 : vector<16x1xf32> to vector<16x1xf32>
    %98 = vector.broadcast %97 : vector<16x1xf32> to vector<16x128xf32>
    %99 = arith.select %96, %98, %94 : vector<16x128xi1>, vector<16x128xf32>
    %c0_38 = arith.constant 0 : index
    %c0_39 = arith.constant 0 : index
    %100 = vector.load %arg9[%c0_38, %c0_39] : memref<16x128xf32, #tpu.memory_space<vmem>>, vector<16x128xf32>
    tpu.vector_store %arg9[%c0_38, %c0_39], %99 {strides = array<i32>} : memref<16x128xf32, #tpu.memory_space<vmem>>, vector<16x128xf32>,
    return
  }
  func.func @transform_0(%arg0: i32) -> (i32, i32) {
    %c0_i32 = arith.constant 0 : i32
    %c0_i32_0 = arith.constant 0 : i32
    return %arg0, %c0_i32 : i32, i32
  }
  func.func @transform_1(%arg0: i32) -> (i32, i32) {
    %c0_i32 = arith.constant 0 : i32
    %c0_i32_0 = arith.constant 0 : i32
    %c0_i32_1 = arith.constant 0 : i32
    return %c0_i32, %c0_i32_0 : i32, i32
  }
  func.func @transform_2(%arg0: i32) -> (i32, i32) {
    %c0_i32 = arith.constant 0 : i32
    %c0_i32_0 = arith.constant 0 : i32
    %c0_i32_1 = arith.constant 0 : i32
    return %c0_i32, %c0_i32_0 : i32, i32
  }
  func.func @transform_3(%arg0: i32) -> (i32, i32) {
    %c0_i32 = arith.constant 0 : i32
    %c0_i32_0 = arith.constant 0 : i32
    %c0_i32_1 = arith.constant 0 : i32
    return %c0_i32, %c0_i32_0 : i32, i32
  }
  func.func @transform_4(%arg0: i32) -> (i32, i32) {
    %c0_i32 = arith.constant 0 : i32
    %c0_i32_0 = arith.constant 0 : i32
    %c0_i32_1 = arith.constant 0 : i32
    return %c0_i32, %c0_i32_0 : i32, i32
  }
  func.func @transform_5(%arg0: i32) -> (i32, i32) {
    %c0_i32 = arith.constant 0 : i32
    %c0_i32_0 = arith.constant 0 : i32
    %c0_i32_1 = arith.constant 0 : i32
    return %c0_i32, %c0_i32_0 : i32, i32
  }
  func.func @transform_6(%arg0: i32) -> (i32, i32) {
    %c0_i32 = arith.constant 0 : i32
    %c0_i32_0 = arith.constant 0 : i32
    %c0_i32_1 = arith.constant 0 : i32
    return %c0_i32, %c0_i32_0 : i32, i32
  }
  func.func @transform_7(%arg0: i32) -> (i32, i32) {
    %c0_i32 = arith.constant 0 : i32
    %c0_i32_0 = arith.constant 0 : i32
    return %arg0, %c0_i32 : i32, i32
  }
  func.func @transform_8(%arg0: i32) -> (i32, i32) {
    %c0_i32 = arith.constant 0 : i32
    %c0_i32_0 = arith.constant 0 : i32
    return %arg0, %c0_i32 : i32, i32
  }
}

</mosaic_0001>

<llo_original>
// kernel: tpu_custom_call.1
$region0: #{tpu_custom_call.1}
  #allocation0 [shape = 'u32[]', space=smem, size = 0x4, offset = 0x4, fixed_abs, tag = 'smem constant byte address 0x4 - core index']
  #allocation1 [shape = 'u32[144,128]{1,0:T(1,128)}', space=vmem, size = 0x12000, scoped, tag = 'internal scratch']
  %s0 = inlined_call_operand.hbm [shape: bf16[16,32], index: 0, kind: input, shape index: {}]
  %s1 = inlined_call_operand.hbm [shape: bf16[32,128], index: 1, kind: input, shape index: {}]
  %s2 = inlined_call_operand.vmem [shape: f32[1,128], index: 2, kind: input, shape index: {}]
  %s3 = inlined_call_operand.hbm [shape: bf16[128,128], index: 3, kind: input, shape index: {}]
  %s4 = inlined_call_operand.vmem [shape: f32[1,128], index: 4, kind: input, shape index: {}]
  %s5 = inlined_call_operand.hbm [shape: bf16[128,256], index: 5, kind: input, shape index: {}]
  %s6 = inlined_call_operand.vmem [shape: f32[1,256], index: 6, kind: input, shape index: {}]
  %s7 = inlined_call_operand.hbm [shape: f32[16,128], index: 7, kind: input, shape index: {}]
  %s8 = inlined_call_operand.hbm [shape: f32[16,128], index: 8, kind: output, shape index: {}]
  %s9 = sld [smem:[#allocation0]]
  $region62: #{tpu_custom_call.1} parent=0
    _
  %s11 = ssub.s32 1, %s9
  %s12 = scalar_select 0, %s11, %s9
  $region1: #{tpu_custom_call.1} parent=0
    #allocation2 [shape = 'u8[4096]{0}', space=vmem, size = 0x1000, scoped, tag = 'input window, operand 0, single buffered']
    #allocation3 [shape = 's32[1]{0}', space=sflag, size = 0x4, scoped, tag = 'scoped memory for tpu_custom_call.1']
    #allocation4 [shape = 's32[1]{0}', space=sflag, size = 0x4, scoped, tag = 'scoped memory for tpu_custom_call.1']
    #allocation5 [shape = 'u8[8192]{0}', space=vmem, size = 0x2000, scoped, tag = 'input window, operand 1, single buffered']
    #allocation6 [shape = 's32[1]{0}', space=sflag, size = 0x4, scoped, tag = 'scoped memory for tpu_custom_call.1']
    #allocation7 [shape = 'u8[32768]{0}', space=vmem, size = 0x8000, scoped, tag = 'input window, operand 3, single buffered']
    #allocation8 [shape = 'u8[65536]{0}', space=vmem, size = 0x10000, scoped, tag = 'input window, operand 5, single buffered']
    #allocation9 [shape = 's32[1]{0}', space=sflag, size = 0x4, scoped, tag = 'scoped memory for tpu_custom_call.1']
    #allocation10 [shape = 'u8[8192]{0}', space=vmem, size = 0x2000, scoped, tag = 'input window, operand 7, single buffered']
    #allocation11 [shape = 'u8[8192]{0}', space=vmem, size = 0x2000, scoped, tag = 'output window, operand 0, single buffered']
    %13 = vsyncpa [#allocation3], 0
    %14 = vsyncpa [#allocation6], 0
    %15 = vsyncpa [#allocation9], 0
    %16 = vsyncpa [#allocation4], 0
    // Predicated region
    $region2: #{tpu_custom_call.1} parent=1 // pred_check
      _
    $region3: #{tpu_custom_call.1} parent=1 // pred_check_branch
      %18 = sbr.rel (0) target = $region5
    $region4: #{tpu_custom_call.1} parent=1 // pred_region
      %s20 = ssub.s32 128, 128
      %21 = vsyncadd [#allocation3], %s20
      %s22 = sshll.u32 [#allocation2], 4
      %s23 = int_to_ptr.vmem [resolvable:$true] %s22
      %28 = dma.hbm_to_vmem [thread:$0]  %s0, 128, %s23, [#allocation3], 64, 64, 4
    $region5: #{tpu_custom_call.1} parent=1 // pred_fallthru
      _
    // Predicated region
    $region6: #{tpu_custom_call.1} parent=1 // pred_check
      _
    $region7: #{tpu_custom_call.1} parent=1 // pred_check_branch
      %30 = sbr.rel (0) target = $region9
    $region8: #{tpu_custom_call.1} parent=1 // pred_region
      %s32 = ssub.s32 256, 256
      %33 = vsyncadd [#allocation6], %s32
      %s34 = sshll.u32 [#allocation5], 4
      %s35 = int_to_ptr.vmem [resolvable:$true] %s34
      %40 = dma.hbm_to_vmem [thread:$0]  %s1, 256, %s35, [#allocation6], 64, 64, 4
    $region9: #{tpu_custom_call.1} parent=1 // pred_fallthru
      _
    // Predicated region
    $region10: #{tpu_custom_call.1} parent=1 // pred_check
      _
    $region11: #{tpu_custom_call.1} parent=1 // pred_check_branch
      %42 = sbr.rel (0) target = $region13
    $region12: #{tpu_custom_call.1} parent=1 // pred_region
      _
    $region13: #{tpu_custom_call.1} parent=1 // pred_fallthru
      _
    // Predicated region
    $region14: #{tpu_custom_call.1} parent=1 // pred_check
      _
    $region15: #{tpu_custom_call.1} parent=1 // pred_check_branch
      %44 = sbr.rel (0) target = $region17
    $region16: #{tpu_custom_call.1} parent=1 // pred_region
      %s46 = ssub.s32 1024, 1024
      %47 = vsyncadd [#allocation6], %s46
      %s48 = sshll.u32 [#allocation7], 4
      %s49 = int_to_ptr.vmem [resolvable:$true] %s48
      %54 = dma.hbm_to_vmem [thread:$0]  %s3, 1024, %s49, [#allocation6], 64, 64, 4
    $region17: #{tpu_custom_call.1} parent=1 // pred_fallthru
      _
    // Predicated region
    $region18: #{tpu_custom_call.1} parent=1 // pred_check
      _
    $region19: #{tpu_custom_call.1} parent=1 // pred_check_branch
      %56 = sbr.rel (0) target = $region21
    $region20: #{tpu_custom_call.1} parent=1 // pred_region
      _
    $region21: #{tpu_custom_call.1} parent=1 // pred_fallthru
      _
    // Predicated region
    $region22: #{tpu_custom_call.1} parent=1 // pred_check
      _
    $region23: #{tpu_custom_call.1} parent=1 // pred_check_branch
      %58 = sbr.rel (0) target = $region25
    $region24: #{tpu_custom_call.1} parent=1 // pred_region
      %s60 = ssub.s32 2048, 2048
      %61 = vsyncadd [#allocation9], %s60
      %s62 = sshll.u32 [#allocation8], 4
      %s63 = int_to_ptr.vmem [resolvable:$true] %s62
      %68 = dma.hbm_to_vmem [thread:$0]  %s5, 2048, %s63, [#allocation9], 128, 128, 8
    $region25: #{tpu_custom_call.1} parent=1 // pred_fallthru
      _
    // Predicated region
    $region26: #{tpu_custom_call.1} parent=1 // pred_check
      _
    $region27: #{tpu_custom_call.1} parent=1 // pred_check_branch
      %70 = sbr.rel (0) target = $region29
    $region28: #{tpu_custom_call.1} parent=1 // pred_region
      _
    $region29: #{tpu_custom_call.1} parent=1 // pred_fallthru
      _
    // Predicated region
    $region30: #{tpu_custom_call.1} parent=1 // pred_check
      _
    $region31: #{tpu_custom_call.1} parent=1 // pred_check_branch
      %72 = sbr.rel (0) target = $region33
    $region32: #{tpu_custom_call.1} parent=1 // pred_region
      %s74 = ssub.s32 256, 256
      %75 = vsyncadd [#allocation9], %s74
      %s76 = sshll.u32 [#allocation10], 4
      %s77 = int_to_ptr.vmem [resolvable:$true] %s76
      %82 = dma.hbm_to_vmem [thread:$0]  %s7, 256, %s77, [#allocation9], 128, 128, 8
    $region33: #{tpu_custom_call.1} parent=1 // pred_fallthru
      _
    // Predicated region
    $region34: #{tpu_custom_call.1} parent=1 // pred_check
      _
    $region35: #{tpu_custom_call.1} parent=1 // pred_check_branch
      %84 = sbr.rel (0) target = $region37
    $region36: #{tpu_custom_call.1} parent=1 // pred_region
      %85 = dma.done [#allocation3], 128
    $region37: #{tpu_custom_call.1} parent=1 // pred_fallthru
      _
    // Predicated region
    $region38: #{tpu_custom_call.1} parent=1 // pred_check
      _
    $region39: #{tpu_custom_call.1} parent=1 // pred_check_branch
      %87 = sbr.rel (0) target = $region41
    $region40: #{tpu_custom_call.1} parent=1 // pred_region
      %88 = dma.done [#allocation6], 256
    $region41: #{tpu_custom_call.1} parent=1 // pred_fallthru
      _
    // Predicated region
    $region42: #{tpu_custom_call.1} parent=1 // pred_check
      _
    $region43: #{tpu_custom_call.1} parent=1 // pred_check_branch
      %90 = sbr.rel (0) target = $region45
    $region44: #{tpu_custom_call.1} parent=1 // pred_region
      %91 = dma.done [#allocation6], 1024
    $region45: #{tpu_custom_call.1} parent=1 // pred_fallthru
      _
    // Predicated region
    $region46: #{tpu_custom_call.1} parent=1 // pred_check
      _
    $region47: #{tpu_custom_call.1} parent=1 // pred_check_branch
      %93 = sbr.rel (0) target = $region49
    $region48: #{tpu_custom_call.1} parent=1 // pred_region
      %94 = dma.done [#allocation9], 2048
    $region49: #{tpu_custom_call.1} parent=1 // pred_fallthru
      _
    // Predicated region
    $region50: #{tpu_custom_call.1} parent=1 // pred_check
      _
    $region51: #{tpu_custom_call.1} parent=1 // pred_check_branch
      %96 = sbr.rel (0) target = $region53
    $region52: #{tpu_custom_call.1} parent=1 // pred_region
      %97 = dma.done [#allocation9], 256
    $region53: #{tpu_custom_call.1} parent=1 // pred_fallthru
      _
    %v99 = vld [vmem:[#allocation2] sm:$0xf]
    %v100 = vld [vmem:[#allocation2 + $0x4] sm:$0xf]
    %v101 = vld [vmem:[#allocation5] sm:$0xf]
    %v102 = vld [vmem:[#allocation5 + $0x4] sm:$0xf]
    %v103 = vld [vmem:[#allocation5 + $0x8] sm:$0xf]
    %v104 = vld [vmem:[#allocation5 + $0xc] sm:$0xf]
    %v105 = vld [vmem:[%s2] sm:$0x1]
    %v107 = vlaneseq
    %v108 = vshrl.u32 %v107, 7
    %v109 = vsub.s32 0, %v108
    %v110 = vrot.slane %v105, %v109
    %v114 = vunpack.c.l.b16 %v99
    %v115 = vunpack.c.l.b16 %v100
    %v116 = vpack.c.b16 %v115, %v114
    %v121 = vunpack.c.l.b16 %v101
    %v122 = vunpack.c.l.b16 %v102
    %v123 = vunpack.c.l.b16 %v103
    %v124 = vunpack.c.l.b16 %v104
    %v125 = vpack.c.b16 %v122, %v121
    %v126 = vpack.c.b16 %v124, %v123
    %vm129 = vcmask 261120
    %v131 = vsel %vm129, %v116, 0
    %133 = vmatprep.subr.bf16.mxu0 0
    %134 = vmatpush1.bf16.msra.mxu0 0
    %135 = vmatprep.subr.bf16.mxu0 0
    %136 = vmatpush1.bf16.msra.mxu0 0
    %137 = vmatprep.subr.bf16.mxu0 0
    %138 = vmatpush1.bf16.msra.mxu0 0
    %139 = vmatprep.subr.bf16.mxu0 0
    %140 = vmatpush1.bf16.msra.mxu0 0
    %141 = vmatprep.subr.bf16.mxu0 0
    %142 = vmatpush1.bf16.msra.mxu0 0
    %143 = vmatprep.subr.bf16.mxu0 0
    %144 = vmatpush1.bf16.msra.mxu0 0
    %145 = vmatprep.subr.bf16.mxu0 0
    %146 = vmatpush1.bf16.msra.mxu0 %v126
    %147 = vmatprep.subr.bf16.mxu0 0
    %148 = vmatpush1.bf16.msra.mxu0 %v125
    %149 = vmatprep.subr.bf16.mxu0 0
    %150 = vmatpush2.bf16.msra.mxu0 0
    %151 = vmatprep.subr.bf16.mxu0 0
    %152 = vmatpush2.bf16.msra.mxu0 0
    %153 = vmatprep.subr.bf16.mxu0 0
    %154 = vmatpush2.bf16.msra.mxu0 0
    %155 = vmatprep.subr.bf16.mxu0 0
    %156 = vmatpush2.bf16.msra.mxu0 0
    %157 = vmatprep.subr.bf16.mxu0 0
    %158 = vmatpush2.bf16.msra.mxu0 0
    %159 = vmatprep.subr.bf16.mxu0 0
    %160 = vmatpush2.bf16.msra.mxu0 0
    %161 = vmatprep.subr.bf16.mxu0 0
    %162 = vmatpush2.bf16.msra.mxu0 0
    %163 = vmatprep.subr.bf16.mxu0 0
    %164 = vmatpush2.bf16.msra.mxu0 0
    %165 = vmatprep.mubr.bf16.mxu0 0
    %166 = vmatmul.mubr.bf16.gmra.mxu0 %v131
    %v167 = vpop.f32.mrf.mxu0
    %v168 = vadd.f32 %v110, %v167
    %v169 = vpop.f32.mrf.mxu0
    %v170 = vpop.f32.mrf.mxu0
    %v171 = vadd.f32 %v110, %v170
    %v172 = vpop.f32.mrf.mxu0
    %173 = vdwg.mxu0
    %v174 = vmax.f32 %v168, 0.0
    %v175 = vmax.f32 %v171, 0.0
    %v176 = vpack.c.bf16 %v175, %v174
    %v177 = vld [vmem:[#allocation7] sm:$0xf]
    %v178 = vld [vmem:[#allocation7 + $0x4] sm:$0xf]
    %v179 = vld [vmem:[#allocation7 + $0x8] sm:$0xf]
    %v180 = vld [vmem:[#allocation7 + $0xc] sm:$0xf]
    %v181 = vld [vmem:[#allocation7 + $0x10] sm:$0xf]
    %v182 = vld [vmem:[#allocation7 + $0x14] sm:$0xf]
    %v183 = vld [vmem:[#allocation7 + $0x18] sm:$0xf]
    %v184 = vld [vmem:[#allocation7 + $0x1c] sm:$0xf]
    %v185 = vld [vmem:[#allocation7 + $0x20] sm:$0xf]
    %v186 = vld [vmem:[#allocation7 + $0x24] sm:$0xf]
    %v187 = vld [vmem:[#allocation7 + $0x28] sm:$0xf]
    %v188 = vld [vmem:[#allocation7 + $0x2c] sm:$0xf]
    %v189 = vld [vmem:[#allocation7 + $0x30] sm:$0xf]
    %v190 = vld [vmem:[#allocation7 + $0x34] sm:$0xf]
    %v191 = vld [vmem:[#allocation7 + $0x38] sm:$0xf]
    %v192 = vld [vmem:[#allocation7 + $0x3c] sm:$0xf]
    %v193 = vld [vmem:[%s4] sm:$0x1]
    %v195 = vlaneseq
    %v196 = vshrl.u32 %v195, 7
    %v197 = vsub.s32 0, %v196
    %v198 = vrot.slane %v193, %v197
    %v216 = vunpack.c.l.b16 %v177
    %v217 = vunpack.c.l.b16 %v178
    %v218 = vunpack.c.l.b16 %v179
    %v219 = vunpack.c.l.b16 %v180
    %v220 = vunpack.c.l.b16 %v181
    %v221 = vunpack.c.l.b16 %v182
    %v222 = vunpack.c.l.b16 %v183
    %v223 = vunpack.c.l.b16 %v184
    %v224 = vunpack.c.l.b16 %v185
    %v225 = vunpack.c.l.b16 %v186
    %v226 = vunpack.c.l.b16 %v187
    %v227 = vunpack.c.l.b16 %v188
    %v228 = vunpack.c.l.b16 %v189
    %v229 = vunpack.c.l.b16 %v190
    %v230 = vunpack.c.l.b16 %v191
    %v231 = vunpack.c.l.b16 %v192
    %v232 = vpack.c.b16 %v217, %v216
    %v233 = vpack.c.b16 %v219, %v218
    %v234 = vpack.c.b16 %v221, %v220
    %v235 = vpack.c.b16 %v223, %v222
    %v236 = vpack.c.b16 %v225, %v224
    %v237 = vpack.c.b16 %v227, %v226
    %v238 = vpack.c.b16 %v229, %v228
    %v239 = vpack.c.b16 %v231, %v230
    %248 = vmatprep.subr.bf16.mxu0 0
    %249 = vmatpush1.bf16.msra.mxu0 %v239
    %250 = vmatprep.subr.bf16.mxu0 0
    %251 = vmatpush1.bf16.msra.mxu0 %v238
    %252 = vmatprep.subr.bf16.mxu0 0
    %253 = vmatpush1.bf16.msra.mxu0 %v237
    %254 = vmatprep.subr.bf16.mxu0 0
    %255 = vmatpush1.bf16.msra.mxu0 %v236
    %256 = vmatprep.subr.bf16.mxu0 0
    %257 = vmatpush1.bf16.msra.mxu0 %v235
    %258 = vmatprep.subr.bf16.mxu0 0
    %259 = vmatpush1.bf16.msra.mxu0 %v234
    %260 = vmatprep.subr.bf16.mxu0 0
    %261 = vmatpush1.bf16.msra.mxu0 %v233
    %262 = vmatprep.subr.bf16.mxu0 0
    %263 = vmatpush1.bf16.msra.mxu0 %v232
    %264 = vmatprep.subr.bf16.mxu0 0
    %265 = vmatpush2.bf16.msra.mxu0 0
    %266 = vmatprep.subr.bf16.mxu0 0
    %267 = vmatpush2.bf16.msra.mxu0 0
    %268 = vmatprep.subr.bf16.mxu0 0
    %269 = vmatpush2.bf16.msra.mxu0 0
    %270 = vmatprep.subr.bf16.mxu0 0
    %271 = vmatpush2.bf16.msra.mxu0 0
    %272 = vmatprep.subr.bf16.mxu0 0
    %273 = vmatpush2.bf16.msra.mxu0 0
    %274 = vmatprep.subr.bf16.mxu0 0
    %275 = vmatpush2.bf16.msra.mxu0 0
    %276 = vmatprep.subr.bf16.mxu0 0
    %277 = vmatpush2.bf16.msra.mxu0 0
    %278 = vmatprep.subr.bf16.mxu0 0
    %279 = vmatpush2.bf16.msra.mxu0 0
    %280 = vmatprep.mubr.bf16.mxu0 0
    %281 = vmatmul.mubr.bf16.gmra.mxu0 %v176
    %v282 = vpop.f32.mrf.mxu0
    %v283 = vadd.f32 %v198, %v282
    %v284 = vpop.f32.mrf.mxu0
    %v285 = vpop.f32.mrf.mxu0
    %v286 = vadd.f32 %v198, %v285
    %v287 = vpop.f32.mrf.mxu0
    %288 = vdwg.mxu0
    %v289 = vmax.f32 %v283, 0.0
    %v290 = vmax.f32 %v286, 0.0
    %v291 = vpack.c.bf16 %v290, %v289
    %v292 = vld [vmem:[#allocation8] sm:$0xff]
    %v293 = vld [vmem:[#allocation8 + $0x8] sm:$0xff]
    %v294 = vld [vmem:[#allocation8 + $0x10] sm:$0xff]
    %v295 = vld [vmem:[#allocation8 + $0x18] sm:$0xff]
    %v296 = vld [vmem:[#allocation8 + $0x20] sm:$0xff]
    %v297 = vld [vmem:[#allocation8 + $0x28] sm:$0xff]
    %v298 = vld [vmem:[#allocation8 + $0x30] sm:$0xff]
    %v299 = vld [vmem:[#allocation8 + $0x38] sm:$0xff]
    %v300 = vld [vmem:[#allocation8 + $0x40] sm:$0xff]
    %v301 = vld [vmem:[#allocation8 + $0x48] sm:$0xff]
    %v302 = vld [vmem:[#allocation8 + $0x50] sm:$0xff]
    %v303 = vld [vmem:[#allocation8 + $0x58] sm:$0xff]
    %v304 = vld [vmem:[#allocation8 + $0x60] sm:$0xff]
    %v305 = vld [vmem:[#allocation8 + $0x68] sm:$0xff]
    %v306 = vld [vmem:[#allocation8 + $0x70] sm:$0xff]
    %v307 = vld [vmem:[#allocation8 + $0x78] sm:$0xff]
    %v308 = vld [vmem:[%s6] sm:$0x3]
    %v310 = vlaneseq
    %v311 = vshrl.u32 %v310, 7
    %v312 = vsub.s32 0, %v311
    %v313 = vrot.slane %v308, %v312
    %v314 = vlaneseq
    %v315 = vshrl.u32 %v314, 7
    %v316 = vsub.s32 1, %v315
    %v317 = vrot.slane %v308, %v316
    %v336 = vunpack.c.l.b16 %v292
    %v337 = vunpack.c.h.b16 %v292
    %v338 = vunpack.c.l.b16 %v293
    %v339 = vunpack.c.h.b16 %v293
    %v340 = vunpack.c.l.b16 %v294
    %v341 = vunpack.c.h.b16 %v294
    %v342 = vunpack.c.l.b16 %v295
    %v343 = vunpack.c.h.b16 %v295
    %v344 = vunpack.c.l.b16 %v296
    %v345 = vunpack.c.h.b16 %v296
    %v346 = vunpack.c.l.b16 %v297
    %v347 = vunpack.c.h.b16 %v297
    %v348 = vunpack.c.l.b16 %v298
    %v349 = vunpack.c.h.b16 %v298
    %v350 = vunpack.c.l.b16 %v299
    %v351 = vunpack.c.h.b16 %v299
    %v352 = vunpack.c.l.b16 %v300
    %v353 = vunpack.c.h.b16 %v300
    %v354 = vunpack.c.l.b16 %v301
    %v355 = vunpack.c.h.b16 %v301
    %v356 = vunpack.c.l.b16 %v302
    %v357 = vunpack.c.h.b16 %v302
    %v358 = vunpack.c.l.b16 %v303
    %v359 = vunpack.c.h.b16 %v303
    %v360 = vunpack.c.l.b16 %v304
    %v361 = vunpack.c.h.b16 %v304
    %v362 = vunpack.c.l.b16 %v305
    %v363 = vunpack.c.h.b16 %v305
    %v364 = vunpack.c.l.b16 %v306
    %v365 = vunpack.c.h.b16 %v306
    %v366 = vunpack.c.l.b16 %v307
    %v367 = vunpack.c.h.b16 %v307
    %v368 = vpack.c.b16 %v338, %v336
    %v369 = vpack.c.b16 %v339, %v337
    %v370 = vpack.c.b16 %v342, %v340
    %v371 = vpack.c.b16 %v343, %v341
    %v372 = vpack.c.b16 %v346, %v344
    %v373 = vpack.c.b16 %v347, %v345
    %v374 = vpack.c.b16 %v350, %v348
    %v375 = vpack.c.b16 %v351, %v349
    %v376 = vpack.c.b16 %v354, %v352
    %v377 = vpack.c.b16 %v355, %v353
    %v378 = vpack.c.b16 %v358, %v356
    %v379 = vpack.c.b16 %v359, %v357
    %v380 = vpack.c.b16 %v362, %v360
    %v381 = vpack.c.b16 %v363, %v361
    %v382 = vpack.c.b16 %v366, %v364
    %v383 = vpack.c.b16 %v367, %v365
    %400 = vmatprep.subr.bf16.mxu0 %v383
    %401 = vmatpush1.bf16.msra.mxu0 %v382
    %402 = vmatprep.subr.bf16.mxu0 %v381
    %403 = vmatpush1.bf16.msra.mxu0 %v380
    %404 = vmatprep.subr.bf16.mxu0 %v379
    %405 = vmatpush1.bf16.msra.mxu0 %v378
    %406 = vmatprep.subr.bf16.mxu0 %v377
    %407 = vmatpush1.bf16.msra.mxu0 %v376
    %408 = vmatprep.subr.bf16.mxu0 %v375
    %409 = vmatpush1.bf16.msra.mxu0 %v374
    %410 = vmatprep.subr.bf16.mxu0 %v373
    %411 = vmatpush1.bf16.msra.mxu0 %v372
    %412 = vmatprep.subr.bf16.mxu0 %v371
    %413 = vmatpush1.bf16.msra.mxu0 %v370
    %414 = vmatprep.subr.bf16.mxu0 %v369
    %415 = vmatpush1.bf16.msra.mxu0 %v368
    %416 = vmatprep.subr.bf16.mxu0 0
    %417 = vmatpush2.bf16.msra.mxu0 0
    %418 = vmatprep.subr.bf16.mxu0 0
    %419 = vmatpush2.bf16.msra.mxu0 0
    %420 = vmatprep.subr.bf16.mxu0 0
    %421 = vmatpush2.bf16.msra.mxu0 0
    %422 = vmatprep.subr.bf16.mxu0 0
    %423 = vmatpush2.bf16.msra.mxu0 0
    %424 = vmatprep.subr.bf16.mxu0 0
    %425 = vmatpush2.bf16.msra.mxu0 0
    %426 = vmatprep.subr.bf16.mxu0 0
    %427 = vmatpush2.bf16.msra.mxu0 0
    %428 = vmatprep.subr.bf16.mxu0 0
    %429 = vmatpush2.bf16.msra.mxu0 0
    %430 = vmatprep.subr.bf16.mxu0 0
    %431 = vmatpush2.bf16.msra.mxu0 0
    %432 = vmatprep.mubr.bf16.mxu0 0
    %433 = vmatmul.mubr.bf16.gmra.mxu0 %v291
    %v434 = vpop.f32.mrf.mxu0
    %v435 = vadd.f32 %v313, %v434
    %v436 = vpop.f32.mrf.mxu0
    %v437 = vadd.f32 %v317, %v436
    %v438 = vpop.f32.mrf.mxu0
    %v439 = vadd.f32 %v313, %v438
    %v440 = vpop.f32.mrf.mxu0
    %v441 = vadd.f32 %v317, %v440
    %442 = vdwg.mxu0
    %v443 = vtanh.pop %v437
    %v444 = vtanh.pop %v441
    %v445 = vadd.f32 %v443, 1.0
    %v446 = vadd.f32 %v444, 1.0
    %v447 = vmul.f32 %v445, 3.5
    %v448 = vmul.f32 %v446, 3.5
    %v449 = vadd.f32 %v447, -5.0
    %v450 = vadd.f32 %v448, -5.0
    %v451 = vmul.f32 %v449, 1.442695
    %v452 = vpow.pop %v451
    %v453 = vmul.f32 %v450, 1.442695
    %v454 = vpow.pop %v453
    %v455 = vld [vmem:[#allocation10] sm:$0xff]
    %v456 = vld [vmem:[#allocation10 + $0x8] sm:$0xff]
    %v457 = vmul.f32 %v452, %v455
    %v458 = vmul.f32 %v454, %v456
    %v459 = vadd.f32 %v435, %v457
    %v460 = vadd.f32 %v439, %v458
    %v461 = vtanh.pop %v459
    %v462 = vtanh.pop %v460
    %v463 = vtanh.pop %v435
    %v464 = vtanh.pop %v439
    %v465 = vmul.f32 %v455, -0.5
    %v466 = vmul.f32 %v456, -0.5
    %v467 = vmul.f32 %v465, %v455
    %v468 = vmul.f32 %v466, %v456
    %v469 = vsub.f32 %v467, 0.9189385
    %v470 = vsub.f32 %v468, 0.9189385
    %v471 = vsub.f32 0.6931472, %v459
    %v472 = vsub.f32 0.6931472, %v460
    %v473 = vmul.f32 %v459, -2.0
    %v474 = vmul.f32 %v460, -2.0
    %v475 = vmax.f32 %v473, 0.0
    %v476 = vmax.f32 %v474, 0.0
    %vm477 = vcmp.ne.f32.partialorder %v473, %v473
    %vm478 = vcmp.ne.f32.partialorder %v474, %v474
    %v479 = vadd.f32 %v473, 0.0
    %v480 = vadd.f32 %v474, 0.0
    %v481 = vand.u32 2147483647, %v473
    %v482 = vand.u32 2147483647, %v474
    %v483 = vsub.f32 0.0, %v481
    %v484 = vsub.f32 0.0, %v482
    %v485 = vmul.f32 %v483, 1.442695
    %v486 = vpow.pop %v485
    %v487 = vmul.f32 %v484, 1.442695
    %v488 = vpow.pop %v487
    %v489 = vadd.f32 %v486, 1.0
    %v490 = vlog2.pop %v489
    %v491 = vmul.f32 %v490, 0.6931472
    %v492 = vmul.f32 -0.5, %v486
    %v493 = vadd.f32 %v492, 1.0
    %v494 = vmul.f32 %v493, %v486
    %v495 = vand.u32 2147483647, %v486
    %vm496 = vcmp.lt.f32.partialorder %v495, 0.0004427343
    %v497 = vsel %vm496, %v494, %v491
    %v498 = vadd.f32 %v488, 1.0
    %v499 = vlog2.pop %v498
    %v500 = vmul.f32 %v499, 0.6931472
    %v501 = vmul.f32 -0.5, %v488
    %v502 = vadd.f32 %v501, 1.0
    %v503 = vmul.f32 %v502, %v488
    %v504 = vand.u32 2147483647, %v488
    %vm505 = vcmp.lt.f32.partialorder %v504, 0.0004427343
    %v506 = vsel %vm505, %v503, %v500
    %v507 = vadd.f32 %v475, %v497
    %v508 = vadd.f32 %v476, %v506
    %v509 = vsel %vm477, %v479, %v507
    %v510 = vsel %vm478, %v480, %v508
    %v511 = vsub.f32 %v471, %v509
    %v512 = vsub.f32 %v472, %v510
    %v513 = vmul.f32 %v511, 2.0
    %v514 = vmul.f32 %v512, 2.0
    %v515 = vsub.f32 %v469, %v449
    %v516 = vsub.f32 %v470, %v450
    %v517 = vsub.f32 %v515, %v513
    %v518 = vsub.f32 %v516, %v514
    %v519 = vlaneseq
    %v520 = vand.u32 %v519, 127
    %vm521 = vcmp.lt.s32.totalorder %v520, 4
    %v522 = vsel %vm521, %v517, 0.0
    %v523 = vsel %vm521, %v518, 0.0
    %524 = vadd.xlane.f32.xlu0 %v522
    %v525 = vpop.xlane.xlu0 %524
    %526 = vadd.xlane.f32.xlu0 %v523
    %v527 = vpop.xlane.xlu0 %526
    %v528 = vlaneseq
    %v529 = vshrl.u32 %v528, 7
    %v530 = vadd.s32 %v529, 8
    %v531 = vadd.s32 %v529, 16
    %v532 = vadd.s32 %v529, 24
    %v533 = vadd.s32 %v529, 32
    %v534 = vadd.s32 %v529, 40
    %v535 = vadd.s32 %v529, 48
    %v536 = vadd.s32 %v529, 56
    %v537 = vadd.s32 %v529, 64
    %v538 = vadd.s32 %v529, 72
    %v539 = vadd.s32 %v529, 80
    %v540 = vadd.s32 %v529, 88
    %v541 = vadd.s32 %v529, 96
    %v542 = vadd.s32 %v529, 104
    %v543 = vadd.s32 %v529, 112
    %v544 = vadd.s32 %v529, 120
    %v545 = vadd.s32 %v529, 4
    %v546 = vadd.s32 %v530, 4
    %v547 = vadd.s32 %v531, 4
    %v548 = vadd.s32 %v532, 4
    %v549 = vadd.s32 %v533, 4
    %v550 = vadd.s32 %v534, 4
    %v551 = vadd.s32 %v535, 4
    %v552 = vadd.s32 %v536, 4
    %v553 = vadd.s32 %v537, 4
    %v554 = vadd.s32 %v538, 4
    %v555 = vadd.s32 %v539, 4
    %v556 = vadd.s32 %v540, 4
    %v557 = vadd.s32 %v541, 4
    %v558 = vadd.s32 %v542, 4
    %v559 = vadd.s32 %v543, 4
    %v560 = vadd.s32 %v544, 4
    %vm561 = vcmp.eq.s32.totalorder %v520, %v545
    %vm562 = vcmp.eq.s32.totalorder %v520, %v546
    %vm563 = vcmp.eq.s32.totalorder %v520, %v547
    %vm564 = vcmp.eq.s32.totalorder %v520, %v548
    %vm565 = vcmp.eq.s32.totalorder %v520, %v549
    %vm566 = vcmp.eq.s32.totalorder %v520, %v550
    %vm567 = vcmp.eq.s32.totalorder %v520, %v551
    %vm568 = vcmp.eq.s32.totalorder %v520, %v552
    %vm569 = vcmp.eq.s32.totalorder %v520, %v553
    %vm570 = vcmp.eq.s32.totalorder %v520, %v554
    %vm571 = vcmp.eq.s32.totalorder %v520, %v555
    %vm572 = vcmp.eq.s32.totalorder %v520, %v556
    %vm573 = vcmp.eq.s32.totalorder %v520, %v557
    %vm574 = vcmp.eq.s32.totalorder %v520, %v558
    %vm575 = vcmp.eq.s32.totalorder %v520, %v559
    %vm576 = vcmp.eq.s32.totalorder %v520, %v560
    %v577 = vsel %vm561, 1, 0
    %v578 = vsel %vm562, 1, 0
    %v579 = vsel %vm563, 1, 0
    %v580 = vsel %vm564, 1, 0
    %v581 = vsel %vm565, 1, 0
    %v582 = vsel %vm566, 1, 0
    %v583 = vsel %vm567, 1, 0
    %v584 = vsel %vm568, 1, 0
    %v585 = vsel %vm569, 1, 0
    %v586 = vsel %vm570, 1, 0
    %v587 = vsel %vm571, 1, 0
    %v588 = vsel %vm572, 1, 0
    %v589 = vsel %vm573, 1, 0
    %v590 = vsel %vm574, 1, 0
    %v591 = vsel %vm575, 1, 0
    %v592 = vsel %vm576, 1, 0
    %v593 = vcvt.s32.f32 %v577
    %v594 = vcvt.s32.f32 %v578
    %v595 = vcvt.s32.f32 %v579
    %v596 = vcvt.s32.f32 %v580
    %v597 = vcvt.s32.f32 %v581
    %v598 = vcvt.s32.f32 %v582
    %v599 = vcvt.s32.f32 %v583
    %v600 = vcvt.s32.f32 %v584
    %v601 = vcvt.s32.f32 %v585
    %v602 = vcvt.s32.f32 %v586
    %v603 = vcvt.s32.f32 %v587
    %v604 = vcvt.s32.f32 %v588
    %v605 = vcvt.s32.f32 %v589
    %v606 = vcvt.s32.f32 %v590
    %v607 = vcvt.s32.f32 %v591
    %v608 = vcvt.s32.f32 %v592
    %v609 = vadd.s32 %v530, 8
    %v610 = vadd.s32 %v531, 8
    %v611 = vadd.s32 %v532, 8
    %v612 = vadd.s32 %v533, 8
    %v613 = vadd.s32 %v534, 8
    %v614 = vadd.s32 %v535, 8
    %v615 = vadd.s32 %v536, 8
    %v616 = vadd.s32 %v537, 8
    %v617 = vadd.s32 %v538, 8
    %v618 = vadd.s32 %v539, 8
    %v619 = vadd.s32 %v540, 8
    %v620 = vadd.s32 %v541, 8
    %v621 = vadd.s32 %v542, 8
    %v622 = vadd.s32 %v543, 8
    %v623 = vadd.s32 %v544, 8
    %vm624 = vcmp.eq.s32.totalorder %v520, %v530
    %vm625 = vcmp.eq.s32.totalorder %v520, %v609
    %vm626 = vcmp.eq.s32.totalorder %v520, %v610
    %vm627 = vcmp.eq.s32.totalorder %v520, %v611
    %vm628 = vcmp.eq.s32.totalorder %v520, %v612
    %vm629 = vcmp.eq.s32.totalorder %v520, %v613
    %vm630 = vcmp.eq.s32.totalorder %v520, %v614
    %vm631 = vcmp.eq.s32.totalorder %v520, %v615
    %vm632 = vcmp.eq.s32.totalorder %v520, %v616
    %vm633 = vcmp.eq.s32.totalorder %v520, %v617
    %vm634 = vcmp.eq.s32.totalorder %v520, %v618
    %vm635 = vcmp.eq.s32.totalorder %v520, %v619
    %vm636 = vcmp.eq.s32.totalorder %v520, %v620
    %vm637 = vcmp.eq.s32.totalorder %v520, %v621
    %vm638 = vcmp.eq.s32.totalorder %v520, %v622
    %vm639 = vcmp.eq.s32.totalorder %v520, %v623
    %v640 = vsel %vm624, 1, 0
    %v641 = vsel %vm625, 1, 0
    %v642 = vsel %vm626, 1, 0
    %v643 = vsel %vm627, 1, 0
    %v644 = vsel %vm628, 1, 0
    %v645 = vsel %vm629, 1, 0
    %v646 = vsel %vm630, 1, 0
    %v647 = vsel %vm631, 1, 0
    %v648 = vsel %vm632, 1, 0
    %v649 = vsel %vm633, 1, 0
    %v650 = vsel %vm634, 1, 0
    %v651 = vsel %vm635, 1, 0
    %v652 = vsel %vm636, 1, 0
    %v653 = vsel %vm637, 1, 0
    %v654 = vsel %vm638, 1, 0
    %v655 = vsel %vm639, 1, 0
    %v656 = vcvt.s32.f32 %v640
    %v657 = vcvt.s32.f32 %v641
    %v658 = vcvt.s32.f32 %v642
    %v659 = vcvt.s32.f32 %v643
    %v660 = vcvt.s32.f32 %v644
    %v661 = vcvt.s32.f32 %v645
    %v662 = vcvt.s32.f32 %v646
    %v663 = vcvt.s32.f32 %v647
    %v664 = vcvt.s32.f32 %v648
    %v665 = vcvt.s32.f32 %v649
    %v666 = vcvt.s32.f32 %v650
    %v667 = vcvt.s32.f32 %v651
    %v668 = vcvt.s32.f32 %v652
    %v669 = vcvt.s32.f32 %v653
    %v670 = vcvt.s32.f32 %v654
    %v671 = vcvt.s32.f32 %v655
    %v672 = vsel %vm521, %v463, 0.0
    %v673 = vsel %vm521, %v464, 0.0
    %v674 = vsel %vm521, %v449, 0.0
    %v675 = vsel %vm521, %v450, 0.0
    %v676 = vsel %vm521, %v461, 0.0
    %v677 = vsel %vm521, %v462, 0.0
    %678 = vmatprep.subr.mxu0 0.0
    %679 = vmatpush1.msra.mxu0 %v608
    %680 = vmatprep.subr.mxu0 0.0
    %681 = vmatpush1.msra.mxu0 %v607
    %682 = vmatprep.subr.mxu0 0.0
    %683 = vmatpush1.msra.mxu0 %v606
    %684 = vmatprep.subr.mxu0 0.0
    %685 = vmatpush1.msra.mxu0 %v605
    %686 = vmatprep.subr.mxu0 0.0
    %687 = vmatpush1.msra.mxu0 %v604
    %688 = vmatprep.subr.mxu0 0.0
    %689 = vmatpush1.msra.mxu0 %v603
    %690 = vmatprep.subr.mxu0 0.0
    %691 = vmatpush1.msra.mxu0 %v602
    %692 = vmatprep.subr.mxu0 0.0
    %693 = vmatpush1.msra.mxu0 %v601
    %694 = vmatprep.subr.mxu0 0.0
    %695 = vmatpush1.msra.mxu0 %v600
    %696 = vmatprep.subr.mxu0 0.0
    %697 = vmatpush1.msra.mxu0 %v599
    %698 = vmatprep.subr.mxu0 0.0
    %699 = vmatpush1.msra.mxu0 %v598
    %700 = vmatprep.subr.mxu0 0.0
    %701 = vmatpush1.msra.mxu0 %v597
    %702 = vmatprep.subr.mxu0 0.0
    %703 = vmatpush1.msra.mxu0 %v596
    %704 = vmatprep.subr.mxu0 0.0
    %705 = vmatpush1.msra.mxu0 %v595
    %706 = vmatprep.subr.mxu0 0.0
    %707 = vmatpush1.msra.mxu0 %v594
    %708 = vmatprep.subr.mxu0 0.0
    %709 = vmatpush1.msra.mxu0 %v593
    %710 = vmatprep.subr.mxu0 0.0
    %711 = vmatpush2.msra.mxu0 0.0
    %712 = vmatprep.subr.mxu0 0.0
    %713 = vmatpush2.msra.mxu0 0.0
    %714 = vmatprep.subr.mxu0 0.0
    %715 = vmatpush2.msra.mxu0 0.0
    %716 = vmatprep.subr.mxu0 0.0
    %717 = vmatpush2.msra.mxu0 0.0
    %718 = vmatprep.subr.mxu0 0.0
    %719 = vmatpush2.msra.mxu0 0.0
    %720 = vmatprep.subr.mxu0 0.0
    %721 = vmatpush2.msra.mxu0 0.0
    %722 = vmatprep.subr.mxu0 0.0
    %723 = vmatpush2.msra.mxu0 0.0
    %724 = vmatprep.subr.mxu0 0.0
    %725 = vmatpush2.msra.mxu0 0.0
    %726 = vmatprep.subr.mxu0 0.0
    %727 = vmatpush2.msra.mxu0 0.0
    %728 = vmatprep.subr.mxu0 0.0
    %729 = vmatpush2.msra.mxu0 0.0
    %730 = vmatprep.subr.mxu0 0.0
    %731 = vmatpush2.msra.mxu0 0.0
    %732 = vmatprep.subr.mxu0 0.0
    %733 = vmatpush2.msra.mxu0 0.0
    %734 = vmatprep.subr.mxu0 0.0
    %735 = vmatpush2.msra.mxu0 0.0
    %736 = vmatprep.subr.mxu0 0.0
    %737 = vmatpush2.msra.mxu0 0.0
    %738 = vmatprep.subr.mxu0 0.0
    %739 = vmatpush2.msra.mxu0 0.0
    %740 = vmatprep.subr.mxu0 0.0
    %741 = vmatpush2.msra.mxu0 0.0
    %742 = vmatprep.mubr.f32.mxu0 0.0
    %743 = vmatmul.mubr.f32.gmra.mxu0 %v672
    %v744 = vpop.f32.mrf.mxu0
    %v745 = vadd.f32 0.0, %v744
    %v746 = vpop.f32.mrf.mxu0
    %747 = vmatprep.mubr.f32.mxu0 0.0
    %748 = vmatmul.mubr.f32.gmra.mxu0 %v673
    %v749 = vpop.f32.mrf.mxu0
    %v750 = vadd.f32 0.0, %v749
    %v751 = vpop.f32.mrf.mxu0
    %752 = vdwg.mxu0
    %v753 = vadd.f32 %v676, %v745
    %v754 = vadd.f32 %v677, %v750
    %755 = vmatprep.subr.mxu0 0.0
    %756 = vmatpush1.msra.mxu0 %v671
    %757 = vmatprep.subr.mxu0 0.0
    %758 = vmatpush1.msra.mxu0 %v670
    %759 = vmatprep.subr.mxu0 0.0
    %760 = vmatpush1.msra.mxu0 %v669
    %761 = vmatprep.subr.mxu0 0.0
    %762 = vmatpush1.msra.mxu0 %v668
    %763 = vmatprep.subr.mxu0 0.0
    %764 = vmatpush1.msra.mxu0 %v667
    %765 = vmatprep.subr.mxu0 0.0
    %766 = vmatpush1.msra.mxu0 %v666
    %767 = vmatprep.subr.mxu0 0.0
    %768 = vmatpush1.msra.mxu0 %v665
    %769 = vmatprep.subr.mxu0 0.0
    %770 = vmatpush1.msra.mxu0 %v664
    %771 = vmatprep.subr.mxu0 0.0
    %772 = vmatpush1.msra.mxu0 %v663
    %773 = vmatprep.subr.mxu0 0.0
    %774 = vmatpush1.msra.mxu0 %v662
    %775 = vmatprep.subr.mxu0 0.0
    %776 = vmatpush1.msra.mxu0 %v661
    %777 = vmatprep.subr.mxu0 0.0
    %778 = vmatpush1.msra.mxu0 %v660
    %779 = vmatprep.subr.mxu0 0.0
    %780 = vmatpush1.msra.mxu0 %v659
    %781 = vmatprep.subr.mxu0 0.0
    %782 = vmatpush1.msra.mxu0 %v658
    %783 = vmatprep.subr.mxu0 0.0
    %784 = vmatpush1.msra.mxu0 %v657
    %785 = vmatprep.subr.mxu0 0.0
    %786 = vmatpush1.msra.mxu0 %v656
    %787 = vmatprep.subr.mxu0 0.0
    %788 = vmatpush2.msra.mxu0 0.0
    %789 = vmatprep.subr.mxu0 0.0
    %790 = vmatpush2.msra.mxu0 0.0
    %791 = vmatprep.subr.mxu0 0.0
    %792 = vmatpush2.msra.mxu0 0.0
    %793 = vmatprep.subr.mxu0 0.0
    %794 = vmatpush2.msra.mxu0 0.0
    %795 = vmatprep.subr.mxu0 0.0
    %796 = vmatpush2.msra.mxu0 0.0
    %797 = vmatprep.subr.mxu0 0.0
    %798 = vmatpush2.msra.mxu0 0.0
    %799 = vmatprep.subr.mxu0 0.0
    %800 = vmatpush2.msra.mxu0 0.0
    %801 = vmatprep.subr.mxu0 0.0
    %802 = vmatpush2.msra.mxu0 0.0
    %803 = vmatprep.subr.mxu0 0.0
    %804 = vmatpush2.msra.mxu0 0.0
    %805 = vmatprep.subr.mxu0 0.0
    %806 = vmatpush2.msra.mxu0 0.0
    %807 = vmatprep.subr.mxu0 0.0
    %808 = vmatpush2.msra.mxu0 0.0
    %809 = vmatprep.subr.mxu0 0.0
    %810 = vmatpush2.msra.mxu0 0.0
    %811 = vmatprep.subr.mxu0 0.0
    %812 = vmatpush2.msra.mxu0 0.0
    %813 = vmatprep.subr.mxu0 0.0
    %814 = vmatpush2.msra.mxu0 0.0
    %815 = vmatprep.subr.mxu0 0.0
    %816 = vmatpush2.msra.mxu0 0.0
    %817 = vmatprep.subr.mxu0 0.0
    %818 = vmatpush2.msra.mxu0 0.0
    %819 = vmatprep.mubr.f32.mxu0 0.0
    %820 = vmatmul.mubr.f32.gmra.mxu0 %v674
    %v821 = vpop.f32.mrf.mxu0
    %v822 = vadd.f32 0.0, %v821
    %v823 = vpop.f32.mrf.mxu0
    %824 = vmatprep.mubr.f32.mxu0 0.0
    %825 = vmatmul.mubr.f32.gmra.mxu0 %v675
    %v826 = vpop.f32.mrf.mxu0
    %v827 = vadd.f32 0.0, %v826
    %v828 = vpop.f32.mrf.mxu0
    %829 = vdwg.mxu0
    %v830 = vadd.f32 %v753, %v822
    %v831 = vadd.f32 %v754, %v827
    %vm832 = vcmp.eq.s32.totalorder %v520, 12
    %v833 = vsel %vm832, %v525, %v830
    %v834 = vsel %vm832, %v527, %v831
    %835 = vst [vmem:[#allocation11] sm:$0xff] %v833
    %836 = vst [vmem:[#allocation11 + $0x8] sm:$0xff] %v834
    // Predicated region
    $region54: #{tpu_custom_call.1} parent=1 // pred_check
      _
    $region55: #{tpu_custom_call.1} parent=1 // pred_check_branch
      %838 = sbr.rel (0) target = $region57
    $region56: #{tpu_custom_call.1} parent=1 // pred_region
      %s840 = ssub.s32 256, 256
      %841 = vsyncadd [#allocation4], %s840
      %s842 = sshll.u32 [#allocation11], 4
      %s843 = int_to_ptr.vmem [resolvable:$true] %s842
      %848 = dma.vmem_to_hbm [thread:$0]  %s843, 256, %s8, [#allocation4], 128, 128, 8
    $region57: #{tpu_custom_call.1} parent=1 // pred_fallthru
      _
    // Predicated region
    $region58: #{tpu_custom_call.1} parent=1 // pred_check
      _
    $region59: #{tpu_custom_call.1} parent=1 // pred_check_branch
      %850 = sbr.rel (0) target = $region61
    $region60: #{tpu_custom_call.1} parent=1 // pred_region
      %851 = dma.done [#allocation4], 256
    $region61: #{tpu_custom_call.1} parent=1 // pred_fallthru
      _
    %852 = vsyncpa [#allocation3], 1
    %853 = vsyncpa [#allocation6], 1
    %854 = vsyncpa [#allocation9], 1
    %855 = vsyncpa [#allocation4], 1

// kernel: tpu_custom_call.1
$region0: #{tpu_custom_call.1}
  #allocation0 [shape = 'u32[]', space=smem, size = 0x4, offset = 0x4, fixed_abs, tag = 'smem constant byte address 0x4 - core index']
  #allocation1 [shape = 'u32[144,128]{1,0:T(1,128)}', space=vmem, size = 0x12000, scoped, tag = 'internal scratch']
  %s0 = inlined_call_operand.hbm [shape: bf16[16,32], index: 0, kind: input, shape index: {}]
  %s1 = inlined_call_operand.hbm [shape: bf16[32,128], index: 1, kind: input, shape index: {}]
  %s2 = inlined_call_operand.vmem [shape: f32[1,128], index: 2, kind: input, shape index: {}]
  %s3 = inlined_call_operand.hbm [shape: bf16[128,128], index: 3, kind: input, shape index: {}]
  %s4 = inlined_call_operand.vmem [shape: f32[1,128], index: 4, kind: input, shape index: {}]
  %s5 = inlined_call_operand.hbm [shape: bf16[128,256], index: 5, kind: input, shape index: {}]
  %s6 = inlined_call_operand.vmem [shape: f32[1,256], index: 6, kind: input, shape index: {}]
  %s7 = inlined_call_operand.hbm [shape: f32[16,128], index: 7, kind: input, shape index: {}]
  %s8 = inlined_call_operand.hbm [shape: f32[16,128], index: 8, kind: output, shape index: {}]
  %s9 = sld [smem:[#allocation0]]
  $region62: #{tpu_custom_call.1} parent=0
    _
  %s11 = ssub.s32 1, %s9
  %s12 = scalar_select 0, %s11, %s9
  $region1: #{tpu_custom_call.1} parent=0
    #allocation2 [shape = 'u8[4096]{0}', space=vmem, size = 0x1000, scoped, tag = 'input window, operand 0, single buffered']
    #allocation3 [shape = 's32[1]{0}', space=sflag, size = 0x4, scoped, tag = 'scoped memory for tpu_custom_call.1']
    #allocation4 [shape = 's32[1]{0}', space=sflag, size = 0x4, scoped, tag = 'scoped memory for tpu_custom_call.1']
    #allocation5 [shape = 'u8[8192]{0}', space=vmem, size = 0x2000, scoped, tag = 'input window, operand 1, single buffered']
    #allocation6 [shape = 's32[1]{0}', space=sflag, size = 0x4, scoped, tag = 'scoped memory for tpu_custom_call.1']
    #allocation7 [shape = 'u8[32768]{0}', space=vmem, size = 0x8000, scoped, tag = 'input window, operand 3, single buffered']
    #allocation8 [shape = 'u8[65536]{0}', space=vmem, size = 0x10000, scoped, tag = 'input window, operand 5, single buffered']
    #allocation9 [shape = 's32[1]{0}', space=sflag, size = 0x4, scoped, tag = 'scoped memory for tpu_custom_call.1']
    #allocation10 [shape = 'u8[8192]{0}', space=vmem, size = 0x2000, scoped, tag = 'input window, operand 7, single buffered']
    #allocation11 [shape = 'u8[8192]{0}', space=vmem, size = 0x2000, scoped, tag = 'output window, operand 0, single buffered']
    %13 = vsyncpa [#allocation3], 0
    %14 = vsyncpa [#allocation6], 0
    %15 = vsyncpa [#allocation9], 0
    %16 = vsyncpa [#allocation4], 0
    // Predicated region
    $region2: #{tpu_custom_call.1} parent=1 // pred_check
      _
    $region3: #{tpu_custom_call.1} parent=1 // pred_check_branch
      %18 = sbr.rel (0) target = $region5
    $region4: #{tpu_custom_call.1} parent=1 // pred_region
      %s20 = ssub.s32 128, 128
      %21 = vsyncadd [#allocation3], %s20
      %s22 = sshll.u32 [#allocation2], 4
      %s23 = int_to_ptr.vmem [resolvable:$true] %s22
      %28 = dma.hbm_to_vmem [thread:$0]  %s0, 128, %s23, [#allocation3], 64, 64, 4
    $region5: #{tpu_custom_call.1} parent=1 // pred_fallthru
      _
    // Predicated region
    $region6: #{tpu_custom_call.1} parent=1 // pred_check
      _
    $region7: #{tpu_custom_call.1} parent=1 // pred_check_branch
      %30 = sbr.rel (0) target = $region9
    $region8: #{tpu_custom_call.1} parent=1 // pred_region
      %s32 = ssub.s32 256, 256
      %33 = vsyncadd [#allocation6], %s32
      %s34 = sshll.u32 [#allocation5], 4
      %s35 = int_to_ptr.vmem [resolvable:$true] %s34
      %40 = dma.hbm_to_vmem [thread:$0]  %s1, 256, %s35, [#allocation6], 64, 64, 4
    $region9: #{tpu_custom_call.1} parent=1 // pred_fallthru
      _
    // Predicated region
    $region10: #{tpu_custom_call.1} parent=1 // pred_check
      _
    $region11: #{tpu_custom_call.1} parent=1 // pred_check_branch
      %42 = sbr.rel (0) target = $region13
    $region12: #{tpu_custom_call.1} parent=1 // pred_region
      _
    $region13: #{tpu_custom_call.1} parent=1 // pred_fallthru
      _
    // Predicated region
    $region14: #{tpu_custom_call.1} parent=1 // pred_check
      _
    $region15: #{tpu_custom_call.1} parent=1 // pred_check_branch
      %44 = sbr.rel (0) target = $region17
    $region16: #{tpu_custom_call.1} parent=1 // pred_region
      %s46 = ssub.s32 1024, 1024
      %47 = vsyncadd [#allocation6], %s46
      %s48 = sshll.u32 [#allocation7], 4
      %s49 = int_to_ptr.vmem [resolvable:$true] %s48
      %54 = dma.hbm_to_vmem [thread:$0]  %s3, 1024, %s49, [#allocation6], 64, 64, 4
    $region17: #{tpu_custom_call.1} parent=1 // pred_fallthru
      _
    // Predicated region
    $region18: #{tpu_custom_call.1} parent=1 // pred_check
      _
    $region19: #{tpu_custom_call.1} parent=1 // pred_check_branch
      %56 = sbr.rel (0) target = $region21
    $region20: #{tpu_custom_call.1} parent=1 // pred_region
      _
    $region21: #{tpu_custom_call.1} parent=1 // pred_fallthru
      _
    // Predicated region
    $region22: #{tpu_custom_call.1} parent=1 // pred_check
      _
    $region23: #{tpu_custom_call.1} parent=1 // pred_check_branch
      %58 = sbr.rel (0) target = $region25
    $region24: #{tpu_custom_call.1} parent=1 // pred_region
      %s60 = ssub.s32 2048, 2048
      %61 = vsyncadd [#allocation9], %s60
      %s62 = sshll.u32 [#allocation8], 4
      %s63 = int_to_ptr.vmem [resolvable:$true] %s62
      %68 = dma.hbm_to_vmem [thread:$0]  %s5, 2048, %s63, [#allocation9], 128, 128, 8
    $region25: #{tpu_custom_call.1} parent=1 // pred_fallthru
      _
    // Predicated region
    $region26: #{tpu_custom_call.1} parent=1 // pred_check
      _
    $region27: #{tpu_custom_call.1} parent=1 // pred_check_branch
      %70 = sbr.rel (0) target = $region29
    $region28: #{tpu_custom_call.1} parent=1 // pred_region
      _
    $region29: #{tpu_custom_call.1} parent=1 // pred_fallthru
      _
    // Predicated region
    $region30: #{tpu_custom_call.1} parent=1 // pred_check
      _
    $region31: #{tpu_custom_call.1} parent=1 // pred_check_branch
      %72 = sbr.rel (0) target = $region33
    $region32: #{tpu_custom_call.1} parent=1 // pred_region
      %s74 = ssub.s32 256, 256
      %75 = vsyncadd [#allocation9], %s74
      %s76 = sshll.u32 [#allocation10], 4
      %s77 = int_to_ptr.vmem [resolvable:$true] %s76
      %82 = dma.hbm_to_vmem [thread:$0]  %s7, 256, %s77, [#allocation9], 128, 128, 8
    $region33: #{tpu_custom_call.1} parent=1 // pred_fallthru
      _
    // Predicated region
    $region34: #{tpu_custom_call.1} parent=1 // pred_check
      _
    $region35: #{tpu_custom_call.1} parent=1 // pred_check_branch
      %84 = sbr.rel (0) target = $region37
    $region36: #{tpu_custom_call.1} parent=1 // pred_region
      %85 = dma.done [#allocation3], 128
    $region37: #{tpu_custom_call.1} parent=1 // pred_fallthru
      _
    // Predicated region
    $region38: #{tpu_custom_call.1} parent=1 // pred_check
      _
    $region39: #{tpu_custom_call.1} parent=1 // pred_check_branch
      %87 = sbr.rel (0) target = $region41
    $region40: #{tpu_custom_call.1} parent=1 // pred_region
      %88 = dma.done [#allocation6], 256
    $region41: #{tpu_custom_call.1} parent=1 // pred_fallthru
      _
    // Predicated region
    $region42: #{tpu_custom_call.1} parent=1 // pred_check
      _
    $region43: #{tpu_custom_call.1} parent=1 // pred_check_branch
      %90 = sbr.rel (0) target = $region45
    $region44: #{tpu_custom_call.1} parent=1 // pred_region
      %91 = dma.done [#allocation6], 1024
    $region45: #{tpu_custom_call.1} parent=1 // pred_fallthru
      _
    // Predicated region
    $region46: #{tpu_custom_call.1} parent=1 // pred_check
      _
    $region47: #{tpu_custom_call.1} parent=1 // pred_check_branch
      %93 = sbr.rel (0) target = $region49
    $region48: #{tpu_custom_call.1} parent=1 // pred_region
      %94 = dma.done [#allocation9], 2048
    $region49: #{tpu_custom_call.1} parent=1 // pred_fallthru
      _
    // Predicated region
    $region50: #{tpu_custom_call.1} parent=1 // pred_check
      _
    $region51: #{tpu_custom_call.1} parent=1 // pred_check_branch
      %96 = sbr.rel (0) target = $region53
    $region52: #{tpu_custom_call.1} parent=1 // pred_region
      %97 = dma.done [#allocation9], 256
    $region53: #{tpu_custom_call.1} parent=1 // pred_fallthru
      _
    %v99 = vld [vmem:[#allocation2] sm:$0xf]
    %v100 = vld [vmem:[#allocation2 + $0x4] sm:$0xf]
    %v101 = vld [vmem:[#allocation5] sm:$0xf]
    %v102 = vld [vmem:[#allocation5 + $0x4] sm:$0xf]
    %v103 = vld [vmem:[#allocation5 + $0x8] sm:$0xf]
    %v104 = vld [vmem:[#allocation5 + $0xc] sm:$0xf]
    %v105 = vld [vmem:[%s2] sm:$0x1]
    %v107 = vlaneseq
    %v108 = vshrl.u32 %v107, 7
    %v109 = vsub.s32 0, %v108
    %v110 = vrot.slane %v105, %v109
    %v114 = vunpack.c.l.b16 %v99
    %v115 = vunpack.c.l.b16 %v100
    %v116 = vpack.c.b16 %v115, %v114
    %v121 = vunpack.c.l.b16 %v101
    %v122 = vunpack.c.l.b16 %v102
    %v123 = vunpack.c.l.b16 %v103
    %v124 = vunpack.c.l.b16 %v104
    %v125 = vpack.c.b16 %v122, %v121
    %v126 = vpack.c.b16 %v124, %v123
    %vm129 = vcmask 261120
    %v131 = vsel %vm129, %v116, 0
    %133 = vmatprep.subr.bf16.mxu0 0
    %134 = vmatpush1.bf16.msra.mxu0 0
    %135 = vmatprep.subr.bf16.mxu0 0
    %136 = vmatpush1.bf16.msra.mxu0 0
    %137 = vmatprep.subr.bf16.mxu0 0
    %138 = vmatpush1.bf16.msra.mxu0 0
    %139 = vmatprep.subr.bf16.mxu0 0
    %140 = vmatpush1.bf16.msra.mxu0 0
    %141 = vmatprep.subr.bf16.mxu0 0
    %142 = vmatpush1.bf16.msra.mxu0 0
    %143 = vmatprep.subr.bf16.mxu0 0
    %144 = vmatpush1.bf16.msra.mxu0 0
    %145 = vmatprep.subr.bf16.mxu0 0
    %146 = vmatpush1.bf16.msra.mxu0 %v126
    %147 = vmatprep.subr.bf16.mxu0 0
    %148 = vmatpush1.bf16.msra.mxu0 %v125
    %149 = vmatprep.subr.bf16.mxu0 0
    %150 = vmatpush2.bf16.msra.mxu0 0
    %151 = vmatprep.subr.bf16.mxu0 0
    %152 = vmatpush2.bf16.msra.mxu0 0
    %153 = vmatprep.subr.bf16.mxu0 0
    %154 = vmatpush2.bf16.msra.mxu0 0
    %155 = vmatprep.subr.bf16.mxu0 0
    %156 = vmatpush2.bf16.msra.mxu0 0
    %157 = vmatprep.subr.bf16.mxu0 0
    %158 = vmatpush2.bf16.msra.mxu0 0
    %159 = vmatprep.subr.bf16.mxu0 0
    %160 = vmatpush2.bf16.msra.mxu0 0
    %161 = vmatprep.subr.bf16.mxu0 0
    %162 = vmatpush2.bf16.msra.mxu0 0
    %163 = vmatprep.subr.bf16.mxu0 0
    %164 = vmatpush2.bf16.msra.mxu0 0
    %165 = vmatprep.mubr.bf16.mxu0 0
    %166 = vmatmul.mubr.bf16.gmra.mxu0 %v131
    %v167 = vpop.f32.mrf.mxu0
    %v168 = vadd.f32 %v110, %v167
    %v169 = vpop.f32.mrf.mxu0
    %v170 = vpop.f32.mrf.mxu0
    %v171 = vadd.f32 %v110, %v170
    %v172 = vpop.f32.mrf.mxu0
    %173 = vdwg.mxu0
    %v174 = vmax.f32 %v168, 0.0
    %v175 = vmax.f32 %v171, 0.0
    %v176 = vpack.c.bf16 %v175, %v174
    %v177 = vld [vmem:[#allocation7] sm:$0xf]
    %v178 = vld [vmem:[#allocation7 + $0x4] sm:$0xf]
    %v179 = vld [vmem:[#allocation7 + $0x8] sm:$0xf]
    %v180 = vld [vmem:[#allocation7 + $0xc] sm:$0xf]
    %v181 = vld [vmem:[#allocation7 + $0x10] sm:$0xf]
    %v182 = vld [vmem:[#allocation7 + $0x14] sm:$0xf]
    %v183 = vld [vmem:[#allocation7 + $0x18] sm:$0xf]
    %v184 = vld [vmem:[#allocation7 + $0x1c] sm:$0xf]
    %v185 = vld [vmem:[#allocation7 + $0x20] sm:$0xf]
    %v186 = vld [vmem:[#allocation7 + $0x24] sm:$0xf]
    %v187 = vld [vmem:[#allocation7 + $0x28] sm:$0xf]
    %v188 = vld [vmem:[#allocation7 + $0x2c] sm:$0xf]
    %v189 = vld [vmem:[#allocation7 + $0x30] sm:$0xf]
    %v190 = vld [vmem:[#allocation7 + $0x34] sm:$0xf]
    %v191 = vld [vmem:[#allocation7 + $0x38] sm:$0xf]
    %v192 = vld [vmem:[#allocation7 + $0x3c] sm:$0xf]
    %v193 = vld [vmem:[%s4] sm:$0x1]
    %v195 = vlaneseq
    %v196 = vshrl.u32 %v195, 7
    %v197 = vsub.s32 0, %v196
    %v198 = vrot.slane %v193, %v197
    %v216 = vunpack.c.l.b16 %v177
    %v217 = vunpack.c.l.b16 %v178
    %v218 = vunpack.c.l.b16 %v179
    %v219 = vunpack.c.l.b16 %v180
    %v220 = vunpack.c.l.b16 %v181
    %v221 = vunpack.c.l.b16 %v182
    %v222 = vunpack.c.l.b16 %v183
    %v223 = vunpack.c.l.b16 %v184
    %v224 = vunpack.c.l.b16 %v185
    %v225 = vunpack.c.l.b16 %v186
    %v226 = vunpack.c.l.b16 %v187
    %v227 = vunpack.c.l.b16 %v188
    %v228 = vunpack.c.l.b16 %v189
    %v229 = vunpack.c.l.b16 %v190
    %v230 = vunpack.c.l.b16 %v191
    %v231 = vunpack.c.l.b16 %v192
    %v232 = vpack.c.b16 %v217, %v216
    %v233 = vpack.c.b16 %v219, %v218
    %v234 = vpack.c.b16 %v221, %v220
    %v235 = vpack.c.b16 %v223, %v222
    %v236 = vpack.c.b16 %v225, %v224
    %v237 = vpack.c.b16 %v227, %v226
    %v238 = vpack.c.b16 %v229, %v228
    %v239 = vpack.c.b16 %v231, %v230
    %248 = vmatprep.subr.bf16.mxu0 0
    %249 = vmatpush1.bf16.msra.mxu0 %v239
    %250 = vmatprep.subr.bf16.mxu0 0
    %251 = vmatpush1.bf16.msra.mxu0 %v238
    %252 = vmatprep.subr.bf16.mxu0 0
    %253 = vmatpush1.bf16.msra.mxu0 %v237
    %254 = vmatprep.subr.bf16.mxu0 0
    %255 = vmatpush1.bf16.msra.mxu0 %v236
    %256 = vmatprep.subr.bf16.mxu0 0
    %257 = vmatpush1.bf16.msra.mxu0 %v235
    %258 = vmatprep.subr.bf16.mxu0 0
    %259 = vmatpush1.bf16.msra.mxu0 %v234
    %260 = vmatprep.subr.bf16.mxu0 0
    %261 = vmatpush1.bf16.msra.mxu0 %v233
    %262 = vmatprep.subr.bf16.mxu0 0
    %263 = vmatpush1.bf16.msra.mxu0 %v232
    %264 = vmatprep.subr.bf16.mxu0 0
    %265 = vmatpush2.bf16.msra.mxu0 0
    %266 = vmatprep.subr.bf16.mxu0 0
    %267 = vmatpush2.bf16.msra.mxu0 0
    %268 = vmatprep.subr.bf16.mxu0 0
    %269 = vmatpush2.bf16.msra.mxu0 0
    %270 = vmatprep.subr.bf16.mxu0 0
    %271 = vmatpush2.bf16.msra.mxu0 0
    %272 = vmatprep.subr.bf16.mxu0 0
    %273 = vmatpush2.bf16.msra.mxu0 0
    %274 = vmatprep.subr.bf16.mxu0 0
    %275 = vmatpush2.bf16.msra.mxu0 0
    %276 = vmatprep.subr.bf16.mxu0 0
    %277 = vmatpush2.bf16.msra.mxu0 0
    %278 = vmatprep.subr.bf16.mxu0 0
    %279 = vmatpush2.bf16.msra.mxu0 0
    %280 = vmatprep.mubr.bf16.mxu0 0
    %281 = vmatmul.mubr.bf16.gmra.mxu0 %v176
    %v282 = vpop.f32.mrf.mxu0
    %v283 = vadd.f32 %v198, %v282
    %v284 = vpop.f32.mrf.mxu0
    %v285 = vpop.f32.mrf.mxu0
    %v286 = vadd.f32 %v198, %v285
    %v287 = vpop.f32.mrf.mxu0
    %288 = vdwg.mxu0
    %v289 = vmax.f32 %v283, 0.0
    %v290 = vmax.f32 %v286, 0.0
    %v291 = vpack.c.bf16 %v290, %v289
    %v292 = vld [vmem:[#allocation8] sm:$0xff]
    %v293 = vld [vmem:[#allocation8 + $0x8] sm:$0xff]
    %v294 = vld [vmem:[#allocation8 + $0x10] sm:$0xff]
    %v295 = vld [vmem:[#allocation8 + $0x18] sm:$0xff]
    %v296 = vld [vmem:[#allocation8 + $0x20] sm:$0xff]
    %v297 = vld [vmem:[#allocation8 + $0x28] sm:$0xff]
    %v298 = vld [vmem:[#allocation8 + $0x30] sm:$0xff]
    %v299 = vld [vmem:[#allocation8 + $0x38] sm:$0xff]
    %v300 = vld [vmem:[#allocation8 + $0x40] sm:$0xff]
    %v301 = vld [vmem:[#allocation8 + $0x48] sm:$0xff]
    %v302 = vld [vmem:[#allocation8 + $0x50] sm:$0xff]
    %v303 = vld [vmem:[#allocation8 + $0x58] sm:$0xff]
    %v304 = vld [vmem:[#allocation8 + $0x60] sm:$0xff]
    %v305 = vld [vmem:[#allocation8 + $0x68] sm:$0xff]
    %v306 = vld [vmem:[#allocation8 + $0x70] sm:$0xff]
    %v307 = vld [vmem:[#allocation8 + $0x78] sm:$0xff]
    %v308 = vld [vmem:[%s6] sm:$0x3]
    %v310 = vlaneseq
    %v311 = vshrl.u32 %v310, 7
    %v312 = vsub.s32 0, %v311
    %v313 = vrot.slane %v308, %v312
    %v314 = vlaneseq
    %v315 = vshrl.u32 %v314, 7
    %v316 = vsub.s32 1, %v315
    %v317 = vrot.slane %v308, %v316
    %v336 = vunpack.c.l.b16 %v292
    %v337 = vunpack.c.h.b16 %v292
    %v338 = vunpack.c.l.b16 %v293
    %v339 = vunpack.c.h.b16 %v293
    %v340 = vunpack.c.l.b16 %v294
    %v341 = vunpack.c.h.b16 %v294
    %v342 = vunpack.c.l.b16 %v295
    %v343 = vunpack.c.h.b16 %v295
    %v344 = vunpack.c.l.b16 %v296
    %v345 = vunpack.c.h.b16 %v296
    %v346 = vunpack.c.l.b16 %v297
    %v347 = vunpack.c.h.b16 %v297
    %v348 = vunpack.c.l.b16 %v298
    %v349 = vunpack.c.h.b16 %v298
    %v350 = vunpack.c.l.b16 %v299
    %v351 = vunpack.c.h.b16 %v299
    %v352 = vunpack.c.l.b16 %v300
    %v353 = vunpack.c.h.b16 %v300
    %v354 = vunpack.c.l.b16 %v301
    %v355 = vunpack.c.h.b16 %v301
    %v356 = vunpack.c.l.b16 %v302
    %v357 = vunpack.c.h.b16 %v302
    %v358 = vunpack.c.l.b16 %v303
    %v359 = vunpack.c.h.b16 %v303
    %v360 = vunpack.c.l.b16 %v304
    %v361 = vunpack.c.h.b16 %v304
    %v362 = vunpack.c.l.b16 %v305
    %v363 = vunpack.c.h.b16 %v305
    %v364 = vunpack.c.l.b16 %v306
    %v365 = vunpack.c.h.b16 %v306
    %v366 = vunpack.c.l.b16 %v307
    %v367 = vunpack.c.h.b16 %v307
    %v368 = vpack.c.b16 %v338, %v336
    %v369 = vpack.c.b16 %v339, %v337
    %v370 = vpack.c.b16 %v342, %v340
    %v371 = vpack.c.b16 %v343, %v341
    %v372 = vpack.c.b16 %v346, %v344
    %v373 = vpack.c.b16 %v347, %v345
    %v374 = vpack.c.b16 %v350, %v348
    %v375 = vpack.c.b16 %v351, %v349
    %v376 = vpack.c.b16 %v354, %v352
    %v377 = vpack.c.b16 %v355, %v353
    %v378 = vpack.c.b16 %v358, %v356
    %v379 = vpack.c.b16 %v359, %v357
    %v380 = vpack.c.b16 %v362, %v360
    %v381 = vpack.c.b16 %v363, %v361
    %v382 = vpack.c.b16 %v366, %v364
    %v383 = vpack.c.b16 %v367, %v365
    %400 = vmatprep.subr.bf16.mxu0 %v383
    %401 = vmatpush1.bf16.msra.mxu0 %v382
    %402 = vmatprep.subr.bf16.mxu0 %v381
    %403 = vmatpush1.bf16.msra.mxu0 %v380
    %404 = vmatprep.subr.bf16.mxu0 %v379
    %405 = vmatpush1.bf16.msra.mxu0 %v378
    %406 = vmatprep.subr.bf16.mxu0 %v377
    %407 = vmatpush1.bf16.msra.mxu0 %v376
    %408 = vmatprep.subr.bf16.mxu0 %v375
    %409 = vmatpush1.bf16.msra.mxu0 %v374
    %410 = vmatprep.subr.bf16.mxu0 %v373
    %411 = vmatpush1.bf16.msra.mxu0 %v372
    %412 = vmatprep.subr.bf16.mxu0 %v371
    %413 = vmatpush1.bf16.msra.mxu0 %v370
    %414 = vmatprep.subr.bf16.mxu0 %v369
    %415 = vmatpush1.bf16.msra.mxu0 %v368
    %416 = vmatprep.subr.bf16.mxu0 0
    %417 = vmatpush2.bf16.msra.mxu0 0
    %418 = vmatprep.subr.bf16.mxu0 0
    %419 = vmatpush2.bf16.msra.mxu0 0
    %420 = vmatprep.subr.bf16.mxu0 0
    %421 = vmatpush2.bf16.msra.mxu0 0
    %422 = vmatprep.subr.bf16.mxu0 0
    %423 = vmatpush2.bf16.msra.mxu0 0
    %424 = vmatprep.subr.bf16.mxu0 0
    %425 = vmatpush2.bf16.msra.mxu0 0
    %426 = vmatprep.subr.bf16.mxu0 0
    %427 = vmatpush2.bf16.msra.mxu0 0
    %428 = vmatprep.subr.bf16.mxu0 0
    %429 = vmatpush2.bf16.msra.mxu0 0
    %430 = vmatprep.subr.bf16.mxu0 0
    %431 = vmatpush2.bf16.msra.mxu0 0
    %432 = vmatprep.mubr.bf16.mxu0 0
    %433 = vmatmul.mubr.bf16.gmra.mxu0 %v291
    %v434 = vpop.f32.mrf.mxu0
    %v435 = vadd.f32 %v313, %v434
    %v436 = vpop.f32.mrf.mxu0
    %v437 = vadd.f32 %v317, %v436
    %v438 = vpop.f32.mrf.mxu0
    %v439 = vadd.f32 %v313, %v438
    %v440 = vpop.f32.mrf.mxu0
    %v441 = vadd.f32 %v317, %v440
    %442 = vdwg.mxu0
    %v443 = vtanh.pop %v437
    %v444 = vtanh.pop %v441
    %v445 = vadd.f32 %v443, 1.0
    %v446 = vadd.f32 %v444, 1.0
    %v447 = vmul.f32 %v445, 3.5
    %v448 = vmul.f32 %v446, 3.5
    %v449 = vadd.f32 %v447, -5.0
    %v450 = vadd.f32 %v448, -5.0
    %v451 = vmul.f32 %v449, 1.442695
    %v452 = vpow.pop %v451
    %v453 = vmul.f32 %v450, 1.442695
    %v454 = vpow.pop %v453
    %v455 = vld [vmem:[#allocation10] sm:$0xff]
    %v456 = vld [vmem:[#allocation10 + $0x8] sm:$0xff]
    %v457 = vmul.f32 %v452, %v455
    %v458 = vmul.f32 %v454, %v456
    %v459 = vadd.f32 %v435, %v457
    %v460 = vadd.f32 %v439, %v458
    %v461 = vtanh.pop %v459
    %v462 = vtanh.pop %v460
    %v463 = vtanh.pop %v435
    %v464 = vtanh.pop %v439
    %v465 = vmul.f32 %v455, -0.5
    %v466 = vmul.f32 %v456, -0.5
    %v467 = vmul.f32 %v465, %v455
    %v468 = vmul.f32 %v466, %v456
    %v469 = vsub.f32 %v467, 0.9189385
    %v470 = vsub.f32 %v468, 0.9189385
    %v471 = vsub.f32 0.6931472, %v459
    %v472 = vsub.f32 0.6931472, %v460
    %v473 = vmul.f32 %v459, -2.0
    %v474 = vmul.f32 %v460, -2.0
    %v475 = vmax.f32 %v473, 0.0
    %v476 = vmax.f32 %v474, 0.0
    %vm477 = vcmp.ne.f32.partialorder %v473, %v473
    %vm478 = vcmp.ne.f32.partialorder %v474, %v474
    %v479 = vadd.f32 %v473, 0.0
    %v480 = vadd.f32 %v474, 0.0
    %v481 = vand.u32 2147483647, %v473
    %v482 = vand.u32 2147483647, %v474
    %v483 = vsub.f32 0.0, %v481
    %v484 = vsub.f32 0.0, %v482
    %v485 = vmul.f32 %v483, 1.442695
    %v486 = vpow.pop %v485
    %v487 = vmul.f32 %v484, 1.442695
    %v488 = vpow.pop %v487
    %v489 = vadd.f32 %v486, 1.0
    %v490 = vlog2.pop %v489
    %v491 = vmul.f32 %v490, 0.6931472
    %v492 = vmul.f32 -0.5, %v486
    %v493 = vadd.f32 %v492, 1.0
    %v494 = vmul.f32 %v493, %v486
    %v495 = vand.u32 2147483647, %v486
    %vm496 = vcmp.lt.f32.partialorder %v495, 0.0004427343
    %v497 = vsel %vm496, %v494, %v491
    %v498 = vadd.f32 %v488, 1.0
    %v499 = vlog2.pop %v498
    %v500 = vmul.f32 %v499, 0.6931472
    %v501 = vmul.f32 -0.5, %v488
    %v502 = vadd.f32 %v501, 1.0
    %v503 = vmul.f32 %v502, %v488
    %v504 = vand.u32 2147483647, %v488
    %vm505 = vcmp.lt.f32.partialorder %v504, 0.0004427343
    %v506 = vsel %vm505, %v503, %v500
    %v507 = vadd.f32 %v475, %v497
    %v508 = vadd.f32 %v476, %v506
    %v509 = vsel %vm477, %v479, %v507
    %v510 = vsel %vm478, %v480, %v508
    %v511 = vsub.f32 %v471, %v509
    %v512 = vsub.f32 %v472, %v510
    %v513 = vmul.f32 %v511, 2.0
    %v514 = vmul.f32 %v512, 2.0
    %v515 = vsub.f32 %v469, %v449
    %v516 = vsub.f32 %v470, %v450
    %v517 = vsub.f32 %v515, %v513
    %v518 = vsub.f32 %v516, %v514
    %v519 = vlaneseq
    %v520 = vand.u32 %v519, 127
    %vm521 = vcmp.lt.s32.totalorder %v520, 4
    %v522 = vsel %vm521, %v517, 0.0
    %v523 = vsel %vm521, %v518, 0.0
    %524 = vadd.xlane.f32.xlu0 %v522
    %v525 = vpop.xlane.xlu0 %524
    %526 = vadd.xlane.f32.xlu0 %v523
    %v527 = vpop.xlane.xlu0 %526
    %v528 = vlaneseq
    %v529 = vshrl.u32 %v528, 7
    %v530 = vadd.s32 %v529, 8
    %v531 = vadd.s32 %v529, 16
    %v532 = vadd.s32 %v529, 24
    %v533 = vadd.s32 %v529, 32
    %v534 = vadd.s32 %v529, 40
    %v535 = vadd.s32 %v529, 48
    %v536 = vadd.s32 %v529, 56
    %v537 = vadd.s32 %v529, 64
    %v538 = vadd.s32 %v529, 72
    %v539 = vadd.s32 %v529, 80
    %v540 = vadd.s32 %v529, 88
    %v541 = vadd.s32 %v529, 96
    %v542 = vadd.s32 %v529, 104
    %v543 = vadd.s32 %v529, 112
    %v544 = vadd.s32 %v529, 120
    %v545 = vadd.s32 %v529, 4
    %v546 = vadd.s32 %v530, 4
    %v547 = vadd.s32 %v531, 4
    %v548 = vadd.s32 %v532, 4
    %v549 = vadd.s32 %v533, 4
    %v550 = vadd.s32 %v534, 4
    %v551 = vadd.s32 %v535, 4
    %v552 = vadd.s32 %v536, 4
    %v553 = vadd.s32 %v537, 4
    %v554 = vadd.s32 %v538, 4
    %v555 = vadd.s32 %v539, 4
    %v556 = vadd.s32 %v540, 4
    %v557 = vadd.s32 %v541, 4
    %v558 = vadd.s32 %v542, 4
    %v559 = vadd.s32 %v543, 4
    %v560 = vadd.s32 %v544, 4
    %vm561 = vcmp.eq.s32.totalorder %v520, %v545
    %vm562 = vcmp.eq.s32.totalorder %v520, %v546
    %vm563 = vcmp.eq.s32.totalorder %v520, %v547
    %vm564 = vcmp.eq.s32.totalorder %v520, %v548
    %vm565 = vcmp.eq.s32.totalorder %v520, %v549
    %vm566 = vcmp.eq.s32.totalorder %v520, %v550
    %vm567 = vcmp.eq.s32.totalorder %v520, %v551
    %vm568 = vcmp.eq.s32.totalorder %v520, %v552
    %vm569 = vcmp.eq.s32.totalorder %v520, %v553
    %vm570 = vcmp.eq.s32.totalorder %v520, %v554
    %vm571 = vcmp.eq.s32.totalorder %v520, %v555
    %vm572 = vcmp.eq.s32.totalorder %v520, %v556
    %vm573 = vcmp.eq.s32.totalorder %v520, %v557
    %vm574 = vcmp.eq.s32.totalorder %v520, %v558
    %vm575 = vcmp.eq.s32.totalorder %v520, %v559
    %vm576 = vcmp.eq.s32.totalorder %v520, %v560
    %v577 = vsel %vm561, 1, 0
    %v578 = vsel %vm562, 1, 0
    %v579 = vsel %vm563, 1, 0
    %v580 = vsel %vm564, 1, 0
    %v581 = vsel %vm565, 1, 0
    %v582 = vsel %vm566, 1, 0
    %v583 = vsel %vm567, 1, 0
    %v584 = vsel %vm568, 1, 0
    %v585 = vsel %vm569, 1, 0
    %v586 = vsel %vm570, 1, 0
    %v587 = vsel %vm571, 1, 0
    %v588 = vsel %vm572, 1, 0
    %v589 = vsel %vm573, 1, 0
    %v590 = vsel %vm574, 1, 0
    %v591 = vsel %vm575, 1, 0
    %v592 = vsel %vm576, 1, 0
    %v593 = vcvt.s32.f32 %v577
    %v594 = vcvt.s32.f32 %v578
    %v595 = vcvt.s32.f32 %v579
    %v596 = vcvt.s32.f32 %v580
    %v597 = vcvt.s32.f32 %v581
    %v598 = vcvt.s32.f32 %v582
    %v599 = vcvt.s32.f32 %v583
    %v600 = vcvt.s32.f32 %v584
    %v601 = vcvt.s32.f32 %v585
    %v602 = vcvt.s32.f32 %v586
    %v603 = vcvt.s32.f32 %v587
    %v604 = vcvt.s32.f32 %v588
    %v605 = vcvt.s32.f32 %v589
    %v606 = vcvt.s32.f32 %v590
    %v607 = vcvt.s32.f32 %v591
    %v608 = vcvt.s32.f32 %v592
    %v609 = vadd.s32 %v530, 8
    %v610 = vadd.s32 %v531, 8
    %v611 = vadd.s32 %v532, 8
    %v612 = vadd.s32 %v533, 8
    %v613 = vadd.s32 %v534, 8
    %v614 = vadd.s32 %v535, 8
    %v615 = vadd.s32 %v536, 8
    %v616 = vadd.s32 %v537, 8
    %v617 = vadd.s32 %v538, 8
    %v618 = vadd.s32 %v539, 8
    %v619 = vadd.s32 %v540, 8
    %v620 = vadd.s32 %v541, 8
    %v621 = vadd.s32 %v542, 8
    %v622 = vadd.s32 %v543, 8
    %v623 = vadd.s32 %v544, 8
    %vm624 = vcmp.eq.s32.totalorder %v520, %v530
    %vm625 = vcmp.eq.s32.totalorder %v520, %v609
    %vm626 = vcmp.eq.s32.totalorder %v520, %v610
    %vm627 = vcmp.eq.s32.totalorder %v520, %v611
    %vm628 = vcmp.eq.s32.totalorder %v520, %v612
    %vm629 = vcmp.eq.s32.totalorder %v520, %v613
    %vm630 = vcmp.eq.s32.totalorder %v520, %v614
    %vm631 = vcmp.eq.s32.totalorder %v520, %v615
    %vm632 = vcmp.eq.s32.totalorder %v520, %v616
    %vm633 = vcmp.eq.s32.totalorder %v520, %v617
    %vm634 = vcmp.eq.s32.totalorder %v520, %v618
    %vm635 = vcmp.eq.s32.totalorder %v520, %v619
    %vm636 = vcmp.eq.s32.totalorder %v520, %v620
    %vm637 = vcmp.eq.s32.totalorder %v520, %v621
    %vm638 = vcmp.eq.s32.totalorder %v520, %v622
    %vm639 = vcmp.eq.s32.totalorder %v520, %v623
    %v640 = vsel %vm624, 1, 0
    %v641 = vsel %vm625, 1, 0
    %v642 = vsel %vm626, 1, 0
    %v643 = vsel %vm627, 1, 0
    %v644 = vsel %vm628, 1, 0
    %v645 = vsel %vm629, 1, 0
    %v646 = vsel %vm630, 1, 0
    %v647 = vsel %vm631, 1, 0
    %v648 = vsel %vm632, 1, 0
    %v649 = vsel %vm633, 1, 0
    %v650 = vsel %vm634, 1, 0
    %v651 = vsel %vm635, 1, 0
    %v652 = vsel %vm636, 1, 0
    %v653 = vsel %vm637, 1, 0
    %v654 = vsel %vm638, 1, 0
    %v655 = vsel %vm639, 1, 0
    %v656 = vcvt.s32.f32 %v640
    %v657 = vcvt.s32.f32 %v641
    %v658 = vcvt.s32.f32 %v642
    %v659 = vcvt.s32.f32 %v643
    %v660 = vcvt.s32.f32 %v644
    %v661 = vcvt.s32.f32 %v645
    %v662 = vcvt.s32.f32 %v646
    %v663 = vcvt.s32.f32 %v647
    %v664 = vcvt.s32.f32 %v648
    %v665 = vcvt.s32.f32 %v649
    %v666 = vcvt.s32.f32 %v650
    %v667 = vcvt.s32.f32 %v651
    %v668 = vcvt.s32.f32 %v652
    %v669 = vcvt.s32.f32 %v653
    %v670 = vcvt.s32.f32 %v654
    %v671 = vcvt.s32.f32 %v655
    %v672 = vsel %vm521, %v463, 0.0
    %v673 = vsel %vm521, %v464, 0.0
    %v674 = vsel %vm521, %v449, 0.0
    %v675 = vsel %vm521, %v450, 0.0
    %v676 = vsel %vm521, %v461, 0.0
    %v677 = vsel %vm521, %v462, 0.0
    %678 = vmatprep.subr.mxu0 0.0
    %679 = vmatpush1.msra.mxu0 %v608
    %680 = vmatprep.subr.mxu0 0.0
    %681 = vmatpush1.msra.mxu0 %v607
    %682 = vmatprep.subr.mxu0 0.0
    %683 = vmatpush1.msra.mxu0 %v606
    %684 = vmatprep.subr.mxu0 0.0
    %685 = vmatpush1.msra.mxu0 %v605
    %686 = vmatprep.subr.mxu0 0.0
    %687 = vmatpush1.msra.mxu0 %v604
    %688 = vmatprep.subr.mxu0 0.0
    %689 = vmatpush1.msra.mxu0 %v603
    %690 = vmatprep.subr.mxu0 0.0
    %691 = vmatpush1.msra.mxu0 %v602
    %692 = vmatprep.subr.mxu0 0.0
    %693 = vmatpush1.msra.mxu0 %v601
    %694 = vmatprep.subr.mxu0 0.0
    %695 = vmatpush1.msra.mxu0 %v600
    %696 = vmatprep.subr.mxu0 0.0
    %697 = vmatpush1.msra.mxu0 %v599
    %698 = vmatprep.subr.mxu0 0.0
    %699 = vmatpush1.msra.mxu0 %v598
    %700 = vmatprep.subr.mxu0 0.0
    %701 = vmatpush1.msra.mxu0 %v597
    %702 = vmatprep.subr.mxu0 0.0
    %703 = vmatpush1.msra.mxu0 %v596
    %704 = vmatprep.subr.mxu0 0.0
    %705 = vmatpush1.msra.mxu0 %v595
    %706 = vmatprep.subr.mxu0 0.0
    %707 = vmatpush1.msra.mxu0 %v594
    %708 = vmatprep.subr.mxu0 0.0
    %709 = vmatpush1.msra.mxu0 %v593
    %710 = vmatprep.subr.mxu0 0.0
    %711 = vmatpush2.msra.mxu0 0.0
    %712 = vmatprep.subr.mxu0 0.0
    %713 = vmatpush2.msra.mxu0 0.0
    %714 = vmatprep.subr.mxu0 0.0
    %715 = vmatpush2.msra.mxu0 0.0
    %716 = vmatprep.subr.mxu0 0.0
    %717 = vmatpush2.msra.mxu0 0.0
    %718 = vmatprep.subr.mxu0 0.0
    %719 = vmatpush2.msra.mxu0 0.0
    %720 = vmatprep.subr.mxu0 0.0
    %721 = vmatpush2.msra.mxu0 0.0
    %722 = vmatprep.subr.mxu0 0.0
    %723 = vmatpush2.msra.mxu0 0.0
    %724 = vmatprep.subr.mxu0 0.0
    %725 = vmatpush2.msra.mxu0 0.0
    %726 = vmatprep.subr.mxu0 0.0
    %727 = vmatpush2.msra.mxu0 0.0
    %728 = vmatprep.subr.mxu0 0.0
    %729 = vmatpush2.msra.mxu0 0.0
    %730 = vmatprep.subr.mxu0 0.0
    %731 = vmatpush2.msra.mxu0 0.0
    %732 = vmatprep.subr.mxu0 0.0
    %733 = vmatpush2.msra.mxu0 0.0
    %734 = vmatprep.subr.mxu0 0.0
    %735 = vmatpush2.msra.mxu0 0.0
    %736 = vmatprep.subr.mxu0 0.0
    %737 = vmatpush2.msra.mxu0 0.0
    %738 = vmatprep.subr.mxu0 0.0
    %739 = vmatpush2.msra.mxu0 0.0
    %740 = vmatprep.subr.mxu0 0.0
    %741 = vmatpush2.msra.mxu0 0.0
    %742 = vmatprep.mubr.f32.mxu0 0.0
    %743 = vmatmul.mubr.f32.gmra.mxu0 %v672
    %v744 = vpop.f32.mrf.mxu0
    %v745 = vadd.f32 0.0, %v744
    %v746 = vpop.f32.mrf.mxu0
    %747 = vmatprep.mubr.f32.mxu0 0.0
    %748 = vmatmul.mubr.f32.gmra.mxu0 %v673
    %v749 = vpop.f32.mrf.mxu0
    %v750 = vadd.f32 0.0, %v749
    %v751 = vpop.f32.mrf.mxu0
    %752 = vdwg.mxu0
    %v753 = vadd.f32 %v676, %v745
    %v754 = vadd.f32 %v677, %v750
    %755 = vmatprep.subr.mxu0 0.0
    %756 = vmatpush1.msra.mxu0 %v671
    %757 = vmatprep.subr.mxu0 0.0
    %758 = vmatpush1.msra.mxu0 %v670
    %759 = vmatprep.subr.mxu0 0.0
    %760 = vmatpush1.msra.mxu0 %v669
    %761 = vmatprep.subr.mxu0 0.0
    %762 = vmatpush1.msra.mxu0 %v668
    %763 = vmatprep.subr.mxu0 0.0
    %764 = vmatpush1.msra.mxu0 %v667
    %765 = vmatprep.subr.mxu0 0.0
    %766 = vmatpush1.msra.mxu0 %v666
    %767 = vmatprep.subr.mxu0 0.0
    %768 = vmatpush1.msra.mxu0 %v665
    %769 = vmatprep.subr.mxu0 0.0
    %770 = vmatpush1.msra.mxu0 %v664
    %771 = vmatprep.subr.mxu0 0.0
    %772 = vmatpush1.msra.mxu0 %v663
    %773 = vmatprep.subr.mxu0 0.0
    %774 = vmatpush1.msra.mxu0 %v662
    %775 = vmatprep.subr.mxu0 0.0
    %776 = vmatpush1.msra.mxu0 %v661
    %777 = vmatprep.subr.mxu0 0.0
    %778 = vmatpush1.msra.mxu0 %v660
    %779 = vmatprep.subr.mxu0 0.0
    %780 = vmatpush1.msra.mxu0 %v659
    %781 = vmatprep.subr.mxu0 0.0
    %782 = vmatpush1.msra.mxu0 %v658
    %783 = vmatprep.subr.mxu0 0.0
    %784 = vmatpush1.msra.mxu0 %v657
    %785 = vmatprep.subr.mxu0 0.0
    %786 = vmatpush1.msra.mxu0 %v656
    %787 = vmatprep.subr.mxu0 0.0
    %788 = vmatpush2.msra.mxu0 0.0
    %789 = vmatprep.subr.mxu0 0.0
    %790 = vmatpush2.msra.mxu0 0.0
    %791 = vmatprep.subr.mxu0 0.0
    %792 = vmatpush2.msra.mxu0 0.0
    %793 = vmatprep.subr.mxu0 0.0
    %794 = vmatpush2.msra.mxu0 0.0
    %795 = vmatprep.subr.mxu0 0.0
    %796 = vmatpush2.msra.mxu0 0.0
    %797 = vmatprep.subr.mxu0 0.0
    %798 = vmatpush2.msra.mxu0 0.0
    %799 = vmatprep.subr.mxu0 0.0
    %800 = vmatpush2.msra.mxu0 0.0
    %801 = vmatprep.subr.mxu0 0.0
    %802 = vmatpush2.msra.mxu0 0.0
    %803 = vmatprep.subr.mxu0 0.0
    %804 = vmatpush2.msra.mxu0 0.0
    %805 = vmatprep.subr.mxu0 0.0
    %806 = vmatpush2.msra.mxu0 0.0
    %807 = vmatprep.subr.mxu0 0.0
    %808 = vmatpush2.msra.mxu0 0.0
    %809 = vmatprep.subr.mxu0 0.0
    %810 = vmatpush2.msra.mxu0 0.0
    %811 = vmatprep.subr.mxu0 0.0
    %812 = vmatpush2.msra.mxu0 0.0
    %813 = vmatprep.subr.mxu0 0.0
    %814 = vmatpush2.msra.mxu0 0.0
    %815 = vmatprep.subr.mxu0 0.0
    %816 = vmatpush2.msra.mxu0 0.0
    %817 = vmatprep.subr.mxu0 0.0
    %818 = vmatpush2.msra.mxu0 0.0
    %819 = vmatprep.mubr.f32.mxu0 0.0
    %820 = vmatmul.mubr.f32.gmra.mxu0 %v674
    %v821 = vpop.f32.mrf.mxu0
    %v822 = vadd.f32 0.0, %v821
    %v823 = vpop.f32.mrf.mxu0
    %824 = vmatprep.mubr.f32.mxu0 0.0
    %825 = vmatmul.mubr.f32.gmra.mxu0 %v675
    %v826 = vpop.f32.mrf.mxu0
    %v827 = vadd.f32 0.0, %v826
    %v828 = vpop.f32.mrf.mxu0
    %829 = vdwg.mxu0
    %v830 = vadd.f32 %v753, %v822
    %v831 = vadd.f32 %v754, %v827
    %vm832 = vcmp.eq.s32.totalorder %v520, 12
    %v833 = vsel %vm832, %v525, %v830
    %v834 = vsel %vm832, %v527, %v831
    %835 = vst [vmem:[#allocation11] sm:$0xff] %v833
    %836 = vst [vmem:[#allocation11 + $0x8] sm:$0xff] %v834
    // Predicated region
    $region54: #{tpu_custom_call.1} parent=1 // pred_check
      _
    $region55: #{tpu_custom_call.1} parent=1 // pred_check_branch
      %838 = sbr.rel (0) target = $region57
    $region56: #{tpu_custom_call.1} parent=1 // pred_region
      %s840 = ssub.s32 256, 256
      %841 = vsyncadd [#allocation4], %s840
      %s842 = sshll.u32 [#allocation11], 4
      %s843 = int_to_ptr.vmem [resolvable:$true] %s842
      %848 = dma.vmem_to_hbm [thread:$0]  %s843, 256, %s8, [#allocation4], 128, 128, 8
    $region57: #{tpu_custom_call.1} parent=1 // pred_fallthru
      _
    // Predicated region
    $region58: #{tpu_custom_call.1} parent=1 // pred_check
      _
    $region59: #{tpu_custom_call.1} parent=1 // pred_check_branch
      %850 = sbr.rel (0) target = $region61
    $region60: #{tpu_custom_call.1} parent=1 // pred_region
      %851 = dma.done [#allocation4], 256
    $region61: #{tpu_custom_call.1} parent=1 // pred_fallthru
      _
    %852 = vsyncpa [#allocation3], 1
    %853 = vsyncpa [#allocation6], 1
    %854 = vsyncpa [#allocation9], 1
    %855 = vsyncpa [#allocation4], 1

</llo_original>
